<compile_context>
chip_gen: v7x
topology: tpu7x:2x2x1
jax: 0.10.0
libtpu: 0.0.40
codegen_flags: <defaults>
</compile_context>

<pallas_src>
import functools

import jax
import jax.numpy as jnp
from jax import lax
from jax.experimental import pallas as pl
from jax.experimental.pallas import tpu as pltpu

SELU_ALPHA = 1.6732632423543772
SELU_SCALE = 1.0507009873554805
NEG_INF = -1e30
VMEM_LIMIT = 48 * 1024 * 1024  # <= v7x 64 MiB physical VMEM per TensorCore

TI = 128   # GAT target-node row tile
TJ = 128   # GAT neighbor column tile (v6e could push 256 with deeper buffering)
CC = 32    # channel chunk for the per-channel GATv2 logit accumulation


def _selu(x):
    return SELU_SCALE * jnp.where(x > 0, x, SELU_ALPHA * (jnp.exp(x) - 1.0))


def _round_up(x, m):
    return (x + m - 1) // m * m


# ----------------------------------------------------------------------------
# Pallas kernel 1: tiled  y = act(x @ W + b)   (bf16 operands, f32 accumulate)
# Only the big fused GATv2 projection (514 -> 2*H*512) goes through this.
# ----------------------------------------------------------------------------
def _linear_kernel(x_ref, w_ref, b_ref, o_ref, acc_ref, *, activation):
    k = pl.program_id(2)

    @pl.when(k == 0)
    def _():
        acc_ref[...] = jnp.zeros_like(acc_ref)

    acc_ref[...] += jnp.dot(x_ref[...], w_ref[...],
                            preferred_element_type=jnp.float32)

    @pl.when(k == pl.num_programs(2) - 1)
    def _():
        y = acc_ref[...] + b_ref[...]
        if activation == "selu":
            y = _selu(y)
        o_ref[...] = y.astype(o_ref.dtype)


def pad_linear_weights(w, b):
    """Pad + bf16-cast a [K, N] weight / [N] bias ONCE (hoisted out of the loop)."""
    K, N = w.shape
    Kp, Npad = _round_up(K, 128), _round_up(N, 128)
    wp = jnp.zeros((Kp, Npad), jnp.bfloat16).at[:K, :N].set(w.astype(jnp.bfloat16))
    bp = jnp.zeros((1, Npad), jnp.float32).at[0, :N].set(b.astype(jnp.float32))
    return wp, bp


@functools.partial(jax.jit, static_argnames=("activation", "out_dtype", "n_out"))
def pallas_linear(x, wp, bp, *, activation=None, out_dtype=jnp.float32, n_out=None):
    """x: [M, K] (any float dtype); wp/bp pre-padded via pad_linear_weights."""
    M, K = x.shape
    Kp, Npad = wp.shape
    tm = min(256, _round_up(M, 16))
    Mp = _round_up(M, tm)
    tk = 512 if (Kp > 1024 and Kp % 512 == 0) else Kp
    tn = 512 if Npad % 512 == 0 else 128

    xp = jnp.zeros((Mp, Kp), jnp.bfloat16).at[:M, :K].set(x.astype(jnp.bfloat16))

    out = pl.pallas_call(
        functools.partial(_linear_kernel, activation=activation),
        out_shape=jax.ShapeDtypeStruct((Mp, Npad), out_dtype),
        grid=(Mp // tm, Npad // tn, Kp // tk),
        in_specs=[
            pl.BlockSpec((tm, tk), lambda i, j, k: (i, k)),
            pl.BlockSpec((tk, tn), lambda i, j, k: (k, j)),
            pl.BlockSpec((1, tn), lambda i, j, k: (0, j)),
        ],
        out_specs=pl.BlockSpec((tm, tn), lambda i, j, k: (i, j)),
        scratch_shapes=[pltpu.VMEM((tm, tn), jnp.float32)],
        compiler_params=pltpu.CompilerParams(
            dimension_semantics=("parallel", "parallel", "arbitrary"),
            vmem_limit_bytes=VMEM_LIMIT,
        ),
    )(xp, wp, bp)
    out = out[:M]
    if n_out is not None:
        out = out[:, :n_out]
    return out


# ----------------------------------------------------------------------------
# Pallas kernel 2: GATv2 deformer (flash-style online softmax, heads in-body)
#   counts : [ni, nj] int32 (scalar prefetch)  nonzero-count per adjacency tile
#   xr3    : [H*C/CC, Np, CC] bf16   lin_r(x) chunk-major (per-channel columns)
#   xlT    : [H*C, Np]        bf16   lin_l(x) transposed (per-channel rows,
#                                    per-head [C, tj] slab for the message matmul)
#   att    : [H*C] f32 (SMEM)        attention vectors, read as scalars
#   adj    : [Np, Np] int8           adj[i, j] = 1 iff edge j -> i (self loops in)
#   bias   : [1, C] f32 ; cw/cb : coord head (512 -> 2) padded to 128 lanes
#   outputs: hidden [Np, C] f32 = selu(mean_h(softmax_j(e_hij) @ xl_h) + bias)
#            coord  [Np, 128] f32 = hidden @ cw + cb   (first 2 lanes are real)
# ----------------------------------------------------------------------------
def _gat_kernel(counts_ref, xr3_ref, xlT_ref, att_ref, adj_ref, bias_ref,
                cw_ref, cb_ref, hid_ref, coord_ref, m_ref, l_ref, pacc_ref,
                *, heads, hidden_size, cc):
    C = hidden_size
    kpc = C // cc                      # channel chunks per head
    i = pl.program_id(0)
    j = pl.program_id(1)
    nj = pl.num_programs(1)
    ti, tj = adj_ref.shape

    @pl.when(j == 0)
    def _init():
        m_ref[...] = jnp.full_like(m_ref, NEG_INF)
        l_ref[...] = jnp.zeros_like(l_ref)
        pacc_ref[...] = jnp.zeros_like(pacc_ref)

    @pl.when(counts_ref[i, j] > 0)     # skip structurally empty adjacency tiles
    def _compute():
        mask = adj_ref[...] != 0       # [ti, tj]
        for h in range(heads):         # heads in-body: adjacency streamed once
            # --- GATv2 logits, per-channel accumulation (no [ti,tj,C] temp) ---
            def chunk_body(k, logits, h=h):
                goff = h * kpc + k
                ch0 = pl.multiple_of(goff * cc, cc)
                xr_cols = xr3_ref[goff].astype(jnp.float32)               # [ti, cc]
                xl_rows = xlT_ref[pl.ds(ch0, cc), :].astype(jnp.float32)  # [cc, tj]
                for c in range(cc):
                    z = xr_cols[:, c:c + 1] + xl_rows[c:c + 1, :]         # [ti, tj]
                    z = jnp.maximum(z, 0.2 * z)                           # leaky_relu
                    logits = logits + att_ref[ch0 + c] * z
                return logits

            logits = lax.fori_loop(0, kpc, chunk_body,
                                   jnp.zeros((ti, tj), jnp.float32))
            logits = jnp.where(mask, logits, NEG_INF)

            # --- online (flash-style) softmax over neighbor column tiles ---
            m_prev = m_ref[h]                                             # [ti, 1]
            m_new = jnp.maximum(m_prev, jnp.max(logits, axis=-1, keepdims=True))
            alpha = jnp.exp(m_prev - m_new)
            p = jnp.where(mask, jnp.exp(logits - m_new), 0.0)
            l_ref[h] = alpha * l_ref[h] + jnp.sum(p, axis=-1, keepdims=True)

            xl_head = xlT_ref[pl.ds(h * C, C), :]                         # [C, tj]
            msg = lax.dot_general(p.astype(jnp.bfloat16), xl_head,
                                  (((1,), (1,)), ((), ())),
                                  preferred_element_type=jnp.float32)     # [ti, C]
            pacc_ref[h] = alpha * pacc_ref[h] + msg
            m_ref[h] = m_new

    @pl.when(j == nj - 1)
    def _epilogue():
        acc = jnp.zeros(hid_ref.shape, jnp.float32)
        for h in range(heads):
            # guard fully-masked (padded) rows against 0/0
            inv_l = pl.reciprocal(jnp.maximum(l_ref[h], 1e-9), approx=True)
            acc = acc + pacc_ref[h] * inv_l
        hidden_out = _selu(acc * (1.0 / heads) + bias_ref[...])
        hid_ref[...] = hidden_out.astype(hid_ref.dtype)
        coord_ref[...] = (jnp.dot(hidden_out.astype(jnp.bfloat16), cw_ref[...],
                                  preferred_element_type=jnp.float32)
                          + cb_ref[...]).astype(coord_ref.dtype)


@functools.partial(jax.jit, static_argnames=("heads", "hidden_size", "cc", "ti", "tj"))
def pallas_gat_deformer(counts, xr3, xlT, att_flat, adj, bias, cw_pad, cb_pad,
                        *, heads, hidden_size, cc=CC, ti=TI, tj=TJ):
    Np = adj.shape[0]
    C = hidden_size
    ni, nj = Np // ti, Np // tj

    hid, coord = pl.pallas_call(
        functools.partial(_gat_kernel, heads=heads, hidden_size=C, cc=cc),
        out_shape=(jax.ShapeDtypeStruct((Np, C), jnp.float32),
                   jax.ShapeDtypeStruct((Np, 128), jnp.float32)),
        grid_spec=pltpu.PrefetchScalarGridSpec(
            num_scalar_prefetch=1,
            grid=(ni, nj),
            in_specs=[
                pl.BlockSpec(((heads * C) // cc, ti, cc),
                             lambda i, j, c: (0, i, 0)),                  # xr3
                pl.BlockSpec((heads * C, tj), lambda i, j, c: (0, j)),    # xlT
                pl.BlockSpec(memory_space=pltpu.MemorySpace.SMEM),        # att (scalars)
                pl.BlockSpec((ti, tj), lambda i, j, c: (i, j)),           # adj (int8)
                pl.BlockSpec((1, C), lambda i, j, c: (0, 0)),             # bias
                pl.BlockSpec((C, 128), lambda i, j, c: (0, 0)),           # coord W (pad)
                pl.BlockSpec((1, 128), lambda i, j, c: (0, 0)),           # coord b (pad)
            ],
            out_specs=(
                pl.BlockSpec((ti, C), lambda i, j, c: (i, 0)),
                pl.BlockSpec((ti, 128), lambda i, j, c: (i, 0)),
            ),
            scratch_shapes=[
                pltpu.VMEM((heads, ti, 1), jnp.float32),   # running max per head
                pltpu.VMEM((heads, ti, 1), jnp.float32),   # running sum per head
                pltpu.VMEM((heads, ti, C), jnp.float32),   # weighted message acc
            ],
        ),
        compiler_params=pltpu.CompilerParams(
            dimension_semantics=("parallel", "arbitrary"),
            vmem_limit_bytes=VMEM_LIMIT,
        ),
    )(counts, xr3, xlT, att_flat, adj, bias, cw_pad, cb_pad)
    return hid, coord


# ----------------------------------------------------------------------------
# Model pieces (small convs / MLPs stay in plain XLA per performance review)
# ----------------------------------------------------------------------------
def gfe_forward(p, x):
    """GlobalFeatExtractor: 4x (conv3x3 + SELU) -> AdaptiveAvgPool2d(1,1) -> [B, 16]."""
    def conv_selu(x, w, b):
        y = lax.conv_general_dilated(
            x, w, window_strides=(1, 1), padding="SAME",
            dimension_numbers=("NCHW", "OIHW", "NCHW"))
        return _selu(y + b[None, :, None, None])

    x = conv_selu(x, p["gfe_w1"], p["gfe_b1"])
    x = conv_selu(x, p["gfe_w2"], p["gfe_b2"])
    x = conv_selu(x, p["gfe_w3"], p["gfe_b3"])
    x = conv_selu(x, p["gfe_w4"], p["gfe_b4"])
    return jnp.mean(x, axis=(2, 3))


def lfe_forward(p, x, src, dst, num_nodes):
    """LocalFeatExtractor: per-edge MLP on [x_i, x_j - x_i], mean-aggregated."""
    x_i = x[dst]
    x_j = x[src]
    ef = jnp.concatenate([x_i, x_j - x_i], axis=1)
    ef = _selu(ef @ p["lfe_w1"] + p["lfe_b1"])
    ef = _selu(ef @ p["lfe_w2"] + p["lfe_b2"])
    ef = _selu(ef @ p["lfe_w3"] + p["lfe_b3"])
    summed = jax.ops.segment_sum(ef, dst, num_segments=num_nodes)
    deg = jax.ops.segment_sum(jnp.ones((ef.shape[0],), jnp.float32), dst,
                              num_segments=num_nodes)
    return summed / jnp.maximum(deg, 1.0)[:, None]


def deformer_step(p, prep, coord_pad, hidden_pad):
    """RecurrentGATConv forward (poly_mesh=False path), node dim already padded."""
    C = p["hidden_size"]
    H = p["heads"]
    Np = coord_pad.shape[0]

    # find_boundary (exact float equality, matching the PyTorch module)
    upper = coord_pad[:, 0] == 1.0
    down = coord_pad[:, 0] == 0.0
    left = coord_pad[:, 1] == 0.0
    right = coord_pad[:, 1] == 1.0

    in_feat = jnp.concatenate([coord_pad, hidden_pad], axis=1)        # [Np, 2 + C]
    # fused lin_l / lin_r projection (one Pallas matmul, pre-padded bf16 weights)
    xlr = pallas_linear(in_feat, prep["w_lr_pad"], prep["b_lr_pad"],
                        out_dtype=jnp.bfloat16, n_out=2 * H * C)
    xl = xlr[:, :H * C]
    xr = xlr[:, H * C:]
    xlT = xl.T                                                        # [H*C, Np]
    xr3 = xr.reshape(Np, (H * C) // CC, CC).transpose(1, 0, 2)        # [H*C/CC, Np, CC]

    hidden_new, coord_raw = pallas_gat_deformer(
        prep["counts"], xr3, xlT, prep["att_flat"], prep["adj_pad"],
        prep["bias"], prep["cw_pad"], prep["cb_pad"],
        heads=H, hidden_size=C)

    # fix_boundary
    out0 = jnp.where(upper, 1.0, coord_raw[:, 0])
    out0 = jnp.where(down, 0.0, out0)
    out1 = jnp.where(left, 0.0, coord_raw[:, 1])
    out1 = jnp.where(right, 1.0, out1)
    # TODO(synk): poly_mesh=True branch (bd_mask coordinate pinning) not exercised here.
    return jnp.stack([out0, out1], axis=1), hidden_new


def mrn_forward(p, data, num_loop=3):
    N = data["x"].shape[0]
    C = p["hidden_size"]
    H = p["heads"]
    coord = data["x"][:, :2]

    conv_feat = gfe_forward(p, data["conv_feat"])                 # [B, 16]
    conv_per_node = conv_feat[data["graph_id"]]                   # repeat_interleave
    local_feat = lfe_forward(p, data["mesh_feat"], data["src"], data["dst"], N)

    hidden_in = jnp.concatenate([data["x"][:, 2:], local_feat, conv_per_node], axis=1)
    hidden = _selu(hidden_in @ p["lin_w"] + p["lin_b"])           # tiny matmul -> XLA

    # ---- loop-invariant prep (hoisted out of the recurrent deformer loop) ----
    Np = _round_up(max(N, TI), TI)                                # TI == TJ
    coord_pad = jnp.zeros((Np, 2), jnp.float32).at[:N].set(coord)
    hidden_pad = jnp.zeros((Np, C), jnp.float32).at[:N].set(hidden)
    adj_pad = jnp.zeros((Np, Np), jnp.int8).at[:N, :N].set(data["adj"].astype(jnp.int8))

    ni, nj = Np // TI, Np // TJ
    counts = adj_pad.astype(jnp.int32).reshape(ni, TI, nj, TJ).sum(axis=(1, 3))

    w_lr = jnp.concatenate([p["gat_wl"], p["gat_wr"]], axis=1)    # [2+C, 2*H*C]
    b_lr = jnp.concatenate([p["gat_bl"], p["gat_br"]], axis=0)
    w_lr_pad, b_lr_pad = pad_linear_weights(w_lr, b_lr)
    cw_pad = jnp.zeros((C, 128), jnp.bfloat16).at[:, :2].set(
        p["coord_w"].astype(jnp.bfloat16))
    cb_pad = jnp.zeros((1, 128), jnp.float32).at[0, :2].set(p["coord_b"])

    prep = {
        "adj_pad": adj_pad, "counts": counts,
        "att_flat": p["gat_att"].reshape(H * C).astype(jnp.float32),
        "bias": p["gat_bias"].reshape(1, C).astype(jnp.float32),
        "w_lr_pad": w_lr_pad, "b_lr_pad": b_lr_pad,
        "cw_pad": cw_pad, "cb_pad": cb_pad,
    }

    for _ in range(num_loop):
        coord_pad, hidden_pad = deformer_step(p, prep, coord_pad, hidden_pad)
    return coord_pad[:N]


# ----------------------------------------------------------------------------
# Deterministic synthetic parameters (shapes follow MRN.__init__)
# ----------------------------------------------------------------------------
def init_params(key):
    gfe_out_c, lfe_out_c = 16, 16
    hidden_size, heads = 512, 6
    deform_in_c, gfe_in_c, lfe_in_c = 7, 2, 4
    all_feat_c = deform_in_c - 2 + gfe_out_c + lfe_out_c   # 37
    gat_in = 2 + hidden_size                                # 514

    keys = iter(jax.random.split(key, 40))

    def w(shape, fan_in):
        return jax.random.normal(next(keys), shape, jnp.float32) / jnp.sqrt(float(fan_in))

    p = {"heads": heads, "hidden_size": hidden_size}
    # GlobalFeatExtractor convs (assumed UM2N channel plan 2 -> 16 -> 32 -> 32 -> 16)
    p["gfe_w1"], p["gfe_b1"] = w((16, gfe_in_c, 3, 3), gfe_in_c * 9), w((16,), 16)
    p["gfe_w2"], p["gfe_b2"] = w((32, 16, 3, 3), 16 * 9), w((32,), 32)
    p["gfe_w3"], p["gfe_b3"] = w((32, 32, 3, 3), 32 * 9), w((32,), 32)
    p["gfe_w4"], p["gfe_b4"] = w((gfe_out_c, 32, 3, 3), 32 * 9), w((gfe_out_c,), 16)
    # LocalFeatExtractor MLP: 2*4 -> 32 -> 64 -> 16
    p["lfe_w1"], p["lfe_b1"] = w((2 * lfe_in_c, 32), 2 * lfe_in_c), w((32,), 32)
    p["lfe_w2"], p["lfe_b2"] = w((32, 64), 32), w((64,), 64)
    p["lfe_w3"], p["lfe_b3"] = w((64, lfe_out_c), 64), w((lfe_out_c,), 16)
    # lin: 37 -> 512
    p["lin_w"], p["lin_b"] = w((all_feat_c, hidden_size), all_feat_c), w((hidden_size,), 64)
    # GATv2Conv: lin_l / lin_r : 514 -> heads*512, att [H, 1, C], bias [512]
    p["gat_wl"], p["gat_bl"] = (w((gat_in, heads * hidden_size), gat_in),
                                w((heads * hidden_size,), 64))
    p["gat_wr"], p["gat_br"] = (w((gat_in, heads * hidden_size), gat_in),
                                w((heads * hidden_size,), 64))
    p["gat_att"] = w((heads, 1, hidden_size), hidden_size)
    p["gat_bias"] = w((hidden_size,), 64)
    # to_coord: 512 -> 2
    p["coord_w"], p["coord_b"] = w((hidden_size, 2), hidden_size), w((2,), 2)
    return p


def make_data(key, n_graphs=2, nodes_per_graph=8, grid_hw=16):
    N = n_graphs * nodes_per_graph
    k1, k2, k3 = jax.random.split(key, 3)

    # bidirectional ring graph per mesh
    src, dst = [], []
    for g in range(n_graphs):
        off = g * nodes_per_graph
        for i in range(nodes_per_graph):
            jj = (i + 1) % nodes_per_graph
            src += [off + i, off + jj]
            dst += [off + jj, off + i]
    src = jnp.array(src, jnp.int32)
    dst = jnp.array(dst, jnp.int32)

    # dense adjacency (target i <- source j) with self loops, for GATv2
    adj = jnp.zeros((N, N), jnp.float32).at[dst, src].set(1.0)
    adj = adj.at[jnp.arange(N), jnp.arange(N)].set(1.0)

    graph_id = jnp.repeat(jnp.arange(n_graphs, dtype=jnp.int32), nodes_per_graph)

    x = jax.random.uniform(k1, (N, 7), jnp.float32)
    # pin a few nodes to exact boundary coordinates to exercise fix_boundary
    x = x.at[0, 0].set(1.0).at[1, 0].set(0.0).at[2, 1].set(0.0).at[3, 1].set(1.0)

    return {
        "x": x,                                                     # [N, 7]
        "conv_feat": jax.random.normal(k2, (n_graphs, 2, grid_hw, grid_hw), jnp.float32),
        "mesh_feat": jax.random.normal(k3, (N, 4), jnp.float32),
        "src": src, "dst": dst, "adj": adj, "graph_id": graph_id,
        "node_num": jnp.array([nodes_per_graph] * n_graphs, jnp.int32),
        "bd_mask": jnp.zeros((N, 1), jnp.float32),                  # unused (poly_mesh=False)
    }


if __name__ == "__main__":
    key = jax.random.PRNGKey(0)
    kp, kd = jax.random.split(key)
    params = init_params(kp)
    data = make_data(kd)

    coord = mrn_forward(params, data, num_loop=3)
    coord = jax.block_until_ready(coord)

    assert coord.shape == (data["x"].shape[0], 2)
    assert bool(jnp.all(jnp.isfinite(coord)))
    # fix_boundary must pin these exactly (last op of each deformer step)
    assert float(coord[0, 0]) == 1.0
    assert float(coord[1, 0]) == 0.0
    assert float(coord[2, 1]) == 0.0
    assert float(coord[3, 1]) == 1.0
    print("KERNEL_OK")
</pallas_src>

<mosaic_0001>
module attributes {stable_mosaic.version = 11 : i64} {
  func.func @_linear_kernel(%arg0: i32, %arg1: i32, %arg2: i32, %arg3: memref<128x640xbf16, #tpu.memory_space<vmem>>, %arg4: memref<640x512xbf16, #tpu.memory_space<vmem>>, %arg5: memref<1x512xf32, #tpu.memory_space<vmem>>, %arg6: memref<128x512xbf16, #tpu.memory_space<vmem>>, %arg7: memref<128x512xf32, #tpu.memory_space<vmem>>) attributes {dimension_semantics = [#tpu.dimension_semantics<parallel>, #tpu.dimension_semantics<parallel>, #tpu.dimension_semantics<arbitrary>], iteration_bounds = array<i64: 1, 12, 1>, scalar_prefetch = 0 : i64, scratch_operands = 1 : i64, tpu.core_type = #tpu.core_type<tc>, window_params = [{transform_indices = @transform_0, window_bounds = array<i64: 128, 640>}, {transform_indices = @transform_1, window_bounds = array<i64: 640, 512>}, {transform_indices = @transform_2, window_bounds = array<i64: 1, 512>}, {transform_indices = @transform_3, window_bounds = array<i64: 128, 512>}]} {
    %c0_i32 = arith.constant 0 : i32
    %0 = arith.cmpi eq, %arg2, %c0_i32 : i32
    %1 = arith.extui %0 : i1 to i32
    %c0_i32_0 = arith.constant 0 : i32
    %2 = arith.cmpi ne, %1, %c0_i32_0 : i32
    scf.if %2 {
      %cst_10 = arith.constant 0.000000e+00 : f32
      %12 = vector.broadcast %cst_10 : f32 to vector<128x512xf32>
      %c0_11 = arith.constant 0 : index
      %c0_12 = arith.constant 0 : index
      %13 = vector.load %arg7[%c0_11, %c0_12] : memref<128x512xf32, #tpu.memory_space<vmem>>, vector<128x512xf32>
      tpu.vector_store %arg7[%c0_11, %c0_12], %12 {strides = array<i32>} : memref<128x512xf32, #tpu.memory_space<vmem>>, vector<128x512xf32>,
    } else {
    }
    %c0 = arith.constant 0 : index
    %c0_1 = arith.constant 0 : index
    %3 = vector.load %arg7[%c0, %c0_1] : memref<128x512xf32, #tpu.memory_space<vmem>>, vector<128x512xf32>
    %c0_2 = arith.constant 0 : index
    %c0_3 = arith.constant 0 : index
    %4 = vector.load %arg3[%c0_2, %c0_3] : memref<128x640xbf16, #tpu.memory_space<vmem>>, vector<128x640xbf16>
    %c0_4 = arith.constant 0 : index
    %c0_5 = arith.constant 0 : index
    %5 = vector.load %arg4[%c0_4, %c0_5] : memref<640x512xbf16, #tpu.memory_space<vmem>>, vector<640x512xbf16>
    %cst = arith.constant dense<0.000000e+00> : vector<128x512xf32>
    %6 = tpu.matmul %4, %5, %cst {dimension_numbers = #tpu.dot_dimension_numbers<[1], [0], [0], [1], [0, 0, 1, 1], [], []>} : vector<128x640xbf16>, vector<640x512xbf16>, vector<128x512xf32> -> vector<128x512xf32>
    %7 = arith.addf %3, %6 : vector<128x512xf32>
    %c0_6 = arith.constant 0 : index
    %c0_7 = arith.constant 0 : index
    %8 = vector.load %arg7[%c0_6, %c0_7] : memref<128x512xf32, #tpu.memory_space<vmem>>, vector<128x512xf32>
    tpu.vector_store %arg7[%c0_6, %c0_7], %7 {strides = array<i32>} : memref<128x512xf32, #tpu.memory_space<vmem>>, vector<128x512xf32>,
    %c0_i32_8 = arith.constant 0 : i32
    %9 = arith.cmpi eq, %arg2, %c0_i32_8 : i32
    %10 = arith.extui %9 : i1 to i32
    %c0_i32_9 = arith.constant 0 : i32
    %11 = arith.cmpi ne, %10, %c0_i32_9 : i32
    scf.if %11 {
      %c0_10 = arith.constant 0 : index
      %c0_11 = arith.constant 0 : index
      %12 = vector.load %arg7[%c0_10, %c0_11] : memref<128x512xf32, #tpu.memory_space<vmem>>, vector<128x512xf32>
      %c0_12 = arith.constant 0 : index
      %c0_13 = arith.constant 0 : index
      %13 = vector.load %arg5[%c0_12, %c0_13] : memref<1x512xf32, #tpu.memory_space<vmem>>, vector<1x512xf32>
      %14 = vector.broadcast %13 : vector<1x512xf32> to vector<128x512xf32>
      %15 = arith.addf %12, %14 : vector<128x512xf32>
      %16 = arith.truncf %15 : vector<128x512xf32> to vector<128x512xbf16>
      %c0_14 = arith.constant 0 : index
      %c0_15 = arith.constant 0 : index
      %17 = vector.load %arg6[%c0_14, %c0_15] : memref<128x512xbf16, #tpu.memory_space<vmem>>, vector<128x512xbf16>
      tpu.vector_store %arg6[%c0_14, %c0_15], %16 {strides = array<i32>} : memref<128x512xbf16, #tpu.memory_space<vmem>>, vector<128x512xbf16>,
    } else {
    }
    return
  }
  func.func @transform_0(%arg0: i32, %arg1: i32, %arg2: i32) -> (i32, i32) {
    %c0_i32 = arith.constant 0 : i32
    return %arg0, %arg2 : i32, i32
  }
  func.func @transform_1(%arg0: i32, %arg1: i32, %arg2: i32) -> (i32, i32) {
    %c0_i32 = arith.constant 0 : i32
    return %arg2, %arg1 : i32, i32
  }
  func.func @transform_2(%arg0: i32, %arg1: i32, %arg2: i32) -> (i32, i32) {
    %c0_i32 = arith.constant 0 : i32
    %c0_i32_0 = arith.constant 0 : i32
    return %c0_i32, %arg1 : i32, i32
  }
  func.func @transform_3(%arg0: i32, %arg1: i32, %arg2: i32) -> (i32, i32) {
    %c0_i32 = arith.constant 0 : i32
    return %arg0, %arg1 : i32, i32
  }
}

</mosaic_0001>

<llo_original>
// kernel: pallas_linear.1
$region0: #{pallas_linear.1}
  #allocation0 [shape = 'u32[]', space=smem, size = 0x4, offset = 0x4, fixed_abs, tag = 'smem constant byte address 0x4 - core index']
  #allocation1 [shape = 'u32[144,128]{1,0:T(1,128)}', space=vmem, size = 0x12000, scoped, tag = 'internal scratch']
  #allocation2 [shape = 'f32[128,512]{1,0:T(8,128)}', space=vmem, size = 0x40000, scoped, tag = 'scratch operand']
  %s0 = inlined_call_operand.vmem [shape: bf16[128,640], index: 0, kind: input, shape index: {}]
  %s1 = inlined_call_operand.hbm [shape: bf16[640,6144], index: 1, kind: input, shape index: {}]
  %s2 = inlined_call_operand.hbm [shape: f32[1,6144], index: 2, kind: input, shape index: {}]
  %s3 = inlined_call_operand.hbm [shape: bf16[128,6144], index: 3, kind: output, shape index: {}]
  %s4 = sld [smem:[#allocation0]]
  $region61: #{pallas_linear.1} parent=0
    _
  %s6 = ssub.s32 1, %s4
  %s7 = scalar_select 0, %s6, %s4
  $region1: #{pallas_linear.1} parent=0
    #allocation3 [shape = 'u8[1310720]{0}', space=vmem, size = 0x140000, scoped, tag = 'input window, operand 1']
    #allocation4 [shape = 's32[2]{0}', space=sflag, size = 0x8, scoped, tag = 'scoped memory for pallas_linear.1']
    #allocation5 [shape = 's32[2]{0}', space=sflag, size = 0x8, scoped, tag = 'scoped memory for pallas_linear.1']
    #allocation6 [shape = 'u8[4096]{0}', space=vmem, size = 0x1000, scoped, tag = 'input window, operand 2']
    #allocation7 [shape = 's32[2]{0}', space=sflag, size = 0x8, scoped, tag = 'scoped memory for pallas_linear.1']
    #allocation8 [shape = 'u8[262144]{0}', space=vmem, size = 0x40000, scoped, tag = 'output window, operand 0']
    %8 = vsyncpa [#allocation4], 0
    %s9 = scalar_lea.sflag [#allocation4], 1
    %10 = vsyncpa %s9, 0
    %11 = vsyncpa [#allocation7], 0
    %s12 = scalar_lea.sflag [#allocation7], 1
    %13 = vsyncpa %s12, 0
    %14 = vsyncpa [#allocation5], 0
    %s15 = scalar_lea.sflag [#allocation5], 1
    %16 = vsyncpa %s15, 0
    loop: start=0, step=1, limit=14
    $region2: #{pallas_linear.1} parent=1 // loop_pre_header
      _
    $region3: #{pallas_linear.1} parent=1 // loop_header
      %s18 = sphi 0, %s22
      %p19 = scmp.ge.s32.totalorder %s18, 14
      %s25 = sphi 0, %s44
      %s26 = sphi 0, %s40
      %s27 = sphi 0, %s36
      %s28 = sphi 0, %s25
      %s29 = sphi 0, %s26
      %s30 = sphi 0, %s27
      %s31 = sphi 0, %s28
      %s32 = sphi 0, %s29
      %s33 = sphi 0, %s30
      %s49 = sphi 0, %s51
      %s52 = sphi 0, %s49
      %s53 = sphi 0, %s52
      %s69 = sphi 0, %s53
      %s77 = sphi 0, %s79
      %s80 = sphi 0, %s77
      %s81 = sphi 0, %s80
      %s97 = sphi 0, %s81
      %s103 = sphi 0, %s105
      %s106 = sphi 0, %s103
      %s107 = sphi 0, %s106
      %s123 = sphi 0, %s107
      %s131 = sphi 0, %s133
      %s134 = sphi 0, %s131
      %s135 = sphi 0, %s134
      %s151 = sphi 0, %s135
    $region4: #{pallas_linear.1} parent=1 // loop_header_branch
      %21 = sbr.rel (%p19) target = $region8
    $region5: #{pallas_linear.1} parent=1 // loop_body
      %s23 = ssub.s32 %s18, 1
      %s24 = ssub.s32 %s18, 2
      %s34 = sadd.s32 1, %s27
      %p35 = scmp.ge.s32.totalorder %s34, 1
      %s36 = scalar_select %p35, 0, %s34
      %s37 = sadd.s32 1, %s26
      %s38 = scalar_select %p35, %s37, %s26
      %p39 = scmp.ge.s32.totalorder %s38, 12
      %s40 = scalar_select %p39, 0, %s38
      %s41 = sadd.s32 1, %s25
      %s42 = scalar_select %p39, %s41, %s25
      %p43 = scmp.ge.s32.totalorder %s42, 1
      %s44 = scalar_select %p43, 0, %s42
      %s45 = ssub.s32 %s25, %s44
      %s46 = ssub.s32 %s27, %s36
      %s47 = sor.u32 %s45, %s46
      %p48 = scmp.eq.s32.totalorder %s47, 0
      %s50 = sadd.s32 %s49, 1
      %s51 = scalar_select %p48, %s49, %s50
      %p54 = pneg %p48
      %p55 = scmp.eq.s32.totalorder %s18, 11
      %p56 = por %p54, %p55
      %p57 = scmp.ne.s32.totalorder %s49, %s52
      %p58 = scmp.eq.s32.totalorder %s18, 0
      %p59 = por %p57, %p58
      %p60 = scmp.ne.s32.totalorder %s49, %s52
      %p61 = scmp.eq.s32.totalorder %s23, 11
      %p62 = por %p60, %p61
      %p63 = scmp.ne.s32.totalorder %s52, %s53
      %p64 = scmp.eq.s32.totalorder %s23, 0
      %p65 = por %p63, %p64
      %p66 = scmp.ne.s32.totalorder %s52, %s53
      %p67 = scmp.eq.s32.totalorder %s24, 11
      %p68 = por %p66, %p67
      %p70 = scmp.ne.s32.totalorder %s53, %s69
      %p71 = scmp.eq.s32.totalorder %s24, 0
      %p72 = por %p70, %p71
      %s73 = ssub.s32 %s27, %s36
      %s74 = ssub.s32 %s26, %s40
      %s75 = sor.u32 %s73, %s74
      %p76 = scmp.eq.s32.totalorder %s75, 0
      %s78 = sadd.s32 %s77, 1
      %s79 = scalar_select %p76, %s77, %s78
      %p82 = pneg %p76
      %p83 = scmp.eq.s32.totalorder %s18, 11
      %p84 = por %p82, %p83
      %p85 = scmp.ne.s32.totalorder %s77, %s80
      %p86 = scmp.eq.s32.totalorder %s18, 0
      %p87 = por %p85, %p86
      %p88 = scmp.ne.s32.totalorder %s77, %s80
      %p89 = scmp.eq.s32.totalorder %s23, 11
      %p90 = por %p88, %p89
      %p91 = scmp.ne.s32.totalorder %s80, %s81
      %p92 = scmp.eq.s32.totalorder %s23, 0
      %p93 = por %p91, %p92
      %p94 = scmp.ne.s32.totalorder %s80, %s81
      %p95 = scmp.eq.s32.totalorder %s24, 11
      %p96 = por %p94, %p95
      %p98 = scmp.ne.s32.totalorder %s81, %s97
      %p99 = scmp.eq.s32.totalorder %s24, 0
      %p100 = por %p98, %p99
      %s101 = ssub.s32 %s26, %s40
      %p102 = scmp.eq.s32.totalorder %s101, 0
      %s104 = sadd.s32 %s103, 1
      %s105 = scalar_select %p102, %s103, %s104
      %p108 = pneg %p102
      %p109 = scmp.eq.s32.totalorder %s18, 11
      %p110 = por %p108, %p109
      %p111 = scmp.ne.s32.totalorder %s103, %s106
      %p112 = scmp.eq.s32.totalorder %s18, 0
      %p113 = por %p111, %p112
      %p114 = scmp.ne.s32.totalorder %s103, %s106
      %p115 = scmp.eq.s32.totalorder %s23, 11
      %p116 = por %p114, %p115
      %p117 = scmp.ne.s32.totalorder %s106, %s107
      %p118 = scmp.eq.s32.totalorder %s23, 0
      %p119 = por %p117, %p118
      %p120 = scmp.ne.s32.totalorder %s106, %s107
      %p121 = scmp.eq.s32.totalorder %s24, 11
      %p122 = por %p120, %p121
      %p124 = scmp.ne.s32.totalorder %s107, %s123
      %p125 = scmp.eq.s32.totalorder %s24, 0
      %p126 = por %p124, %p125
      %s127 = ssub.s32 %s25, %s44
      %s128 = ssub.s32 %s26, %s40
      %s129 = sor.u32 %s127, %s128
      %p130 = scmp.eq.s32.totalorder %s129, 0
      %s132 = sadd.s32 %s131, 1
      %s133 = scalar_select %p130, %s131, %s132
      %p136 = pneg %p130
      %p137 = scmp.eq.s32.totalorder %s18, 11
      %p138 = por %p136, %p137
      %p139 = scmp.ne.s32.totalorder %s131, %s134
      %p140 = scmp.eq.s32.totalorder %s18, 0
      %p141 = por %p139, %p140
      %p142 = scmp.ne.s32.totalorder %s131, %s134
      %p143 = scmp.eq.s32.totalorder %s23, 11
      %p144 = por %p142, %p143
      %p145 = scmp.ne.s32.totalorder %s134, %s135
      %p146 = scmp.eq.s32.totalorder %s23, 0
      %p147 = por %p145, %p146
      %p148 = scmp.ne.s32.totalorder %s134, %s135
      %p149 = scmp.eq.s32.totalorder %s24, 11
      %p150 = por %p148, %p149
      %p152 = scmp.ne.s32.totalorder %s135, %s151
      %p153 = scmp.eq.s32.totalorder %s24, 0
      %p154 = por %p152, %p153
      %p155 = scmp.le.s32.totalorder 1, %s18
      %p156 = scmp.lt.s32.totalorder %s18, 13
      %p157 = pnand %p155, %p156
      %p158 = pneg %p157
      // Predicated region
      $region9: #{pallas_linear.1} parent=5 // pred_check
        _
      $region10: #{pallas_linear.1} parent=5 // pred_check_branch
        %160 = sbr.rel (%p157) target = $region12
      $region11: #{pallas_linear.1} parent=5 // pred_region
        %s161 = ssub.s32 %s18, 1
        // Predicated region
        $region13: #{pallas_linear.1} parent=11 // pred_check
          %p162 = pneg %p65
        $region14: #{pallas_linear.1} parent=11 // pred_check_branch
          %164 = sbr.rel (%p162) target = $region16
        $region15: #{pallas_linear.1} parent=11 // pred_region
          %s165 = smul.u32 16, %s28
          %s166 = smul.u32 5, %s30
          %p167 = scmp.lt.s32.totalorder %s165, 15
          %s168 = scalar_select %p167, %s165, 15
          %p169 = scmp.lt.s32.totalorder %s166, 4
          %s170 = scalar_select %p169, %s166, 4
          %s171 = smul.addr %s168, 5
          %s172 = sadd.s32 %s170, %s171
          %s173 = smul.addr %s172, 4
          %s174 = scalar_lea.vmem %s0, %s173
          %s175 = smul.u32 16, %s28
          %s176 = smul.u32 5, %s30
        $region16: #{pallas_linear.1} parent=11 // pred_fallthru
          _
      $region12: #{pallas_linear.1} parent=5 // pred_fallthru
        _
      %p177 = scmp.lt.s32.totalorder %s18, 12
      // Predicated region
      $region17: #{pallas_linear.1} parent=5 // pred_check
        %p178 = pneg %p177
      $region18: #{pallas_linear.1} parent=5 // pred_check_branch
        %180 = sbr.rel (%p178) target = $region20
      $region19: #{pallas_linear.1} parent=5 // pred_region
        // Predicated region
        $region21: #{pallas_linear.1} parent=19 // pred_check
          %p181 = pneg %p87
        $region22: #{pallas_linear.1} parent=19 // pred_check_branch
          %183 = sbr.rel (%p181) target = $region24
        $region23: #{pallas_linear.1} parent=19 // pred_region
          %s184 = sand.u32 %s77, 1
          %s185 = scalar_lea.sflag [#allocation4], %s184
          %s186 = sand.u32 %s77, 1
          %s187 = smul.addr %s186, 1280
          %s188 = scalar_lea.vmem [#allocation3], %s187
          %s189 = smul.u32 80, %s27
          %s190 = smul.u32 4, %s26
          %s192 = ssub.s32 20480, 20480
          %193 = vsyncadd %s185, %s192
          %s194 = smul.addr %s189, 48
          %s195 = sadd.s32 %s190, %s194
          %s196 = smul.addr %s195, 64
          %s197 = scalar_lea.hbm %s1, %s196
          %s198 = sshll.u32 %s188, 4
          %s199 = int_to_ptr.vmem [resolvable:$true] %s198
          %204 = dma.hbm_to_vmem [thread:$0]  %s197, 20480, %s199, %s185, 3072, 256, 16
        $region24: #{pallas_linear.1} parent=19 // pred_fallthru
          _
        // Predicated region
        $region25: #{pallas_linear.1} parent=19 // pred_check
          %p205 = pneg %p113
        $region26: #{pallas_linear.1} parent=19 // pred_check_branch
          %207 = sbr.rel (%p205) target = $region28
        $region27: #{pallas_linear.1} parent=19 // pred_region
          %s208 = sand.u32 %s103, 1
          %s209 = scalar_lea.sflag [#allocation7], %s208
          %s210 = sand.u32 %s103, 1
          %s211 = smul.addr %s210, 4
          %s212 = scalar_lea.vmem [#allocation6], %s211
          %s213 = smul.u32 4, %s26
          %s215 = ssub.s32 64, 64
          %216 = vsyncadd %s209, %s215
          %s217 = smul.addr %s213, 16
          %s218 = scalar_lea.hbm %s2, %s217
          %s220 = sshll.u32 %s212, 4
          %s221 = int_to_ptr.vmem [resolvable:$true] %s220
          %223 = dma.hbm_to_vmem [thread:$0]  %s218, 64, %s221, %s209
        $region28: #{pallas_linear.1} parent=19 // pred_fallthru
          _
      $region20: #{pallas_linear.1} parent=5 // pred_fallthru
        _
      %p224 = scmp.le.s32.totalorder 1, %s18
      %p225 = scmp.lt.s32.totalorder %s18, 13
      %p226 = pnand %p224, %p225
      %p227 = pneg %p226
      // Predicated region
      $region29: #{pallas_linear.1} parent=5 // pred_check
        _
      $region30: #{pallas_linear.1} parent=5 // pred_check_branch
        %229 = sbr.rel (%p226) target = $region32
      $region31: #{pallas_linear.1} parent=5 // pred_region
        %s230 = ssub.s32 %s18, 1
        %s231 = sand.u32 %s80, 1
        %s232 = scalar_lea.sflag [#allocation4], %s231
        %s233 = sand.u32 %s80, 1
        %s234 = smul.addr %s233, 1280
        %s235 = scalar_lea.vmem [#allocation3], %s234
        // Predicated region
        $region33: #{pallas_linear.1} parent=31 // pred_check
          %p236 = pneg %p93
        $region34: #{pallas_linear.1} parent=31 // pred_check_branch
          %238 = sbr.rel (%p236) target = $region36
        $region35: #{pallas_linear.1} parent=31 // pred_region
          %239 = dma.done %s232, 20480
        $region36: #{pallas_linear.1} parent=31 // pred_fallthru
          _
        %s240 = sand.u32 %s106, 1
        %s241 = scalar_lea.sflag [#allocation7], %s240
        %s242 = sand.u32 %s106, 1
        %s243 = smul.addr %s242, 4
        %s244 = scalar_lea.vmem [#allocation6], %s243
        // Predicated region
        $region37: #{pallas_linear.1} parent=31 // pred_check
          %p245 = pneg %p119
        $region38: #{pallas_linear.1} parent=31 // pred_check_branch
          %247 = sbr.rel (%p245) target = $region40
        $region39: #{pallas_linear.1} parent=31 // pred_region
          %248 = dma.done %s241, 64
        $region40: #{pallas_linear.1} parent=31 // pred_fallthru
          _
        %s249 = smul.u32 16, %s28
        %s250 = smul.u32 5, %s30
        %p251 = scmp.lt.s32.totalorder %s249, 15
        %s252 = scalar_select %p251, %s249, 15
        %p253 = scmp.lt.s32.totalorder %s250, 4
        %s254 = scalar_select %p253, %s250, 4
        %s255 = smul.addr %s252, 5
        %s256 = sadd.s32 %s254, %s255
        %s257 = smul.addr %s256, 4
        %s258 = scalar_lea.vmem %s0, %s257
        %p259 = pneg %p65
        %p260 = pneg %p62
        %s261 = sand.u32 %s80, 1
        %s262 = scalar_lea.sflag [#allocation4], %s261
        %s263 = sand.u32 %s80, 1
        %s264 = smul.addr %s263, 1280
        %s265 = scalar_lea.vmem [#allocation3], %s264
        %p266 = pneg %p93
        %p267 = pneg %p90
        %s268 = sand.u32 %s106, 1
        %s269 = scalar_lea.sflag [#allocation7], %s268
        %s270 = sand.u32 %s106, 1
        %s271 = smul.addr %s270, 4
        %s272 = scalar_lea.vmem [#allocation6], %s271
        %p273 = pneg %p119
        %p274 = pneg %p116
        %p275 = pneg %p147
        %p276 = pneg %p144
        %s277 = sand.u32 %s134, 1
        %s278 = scalar_lea.sflag [#allocation5], %s277
        %s279 = sand.u32 %s134, 1
        %s280 = smul.addr %s279, 256
        %s281 = scalar_lea.vmem [#allocation8], %s280
        %s282 = smul.u32 16, %s28
        %s283 = smul.u32 5, %s30
        %p284 = scmp.lt.s32.totalorder %s282, 15
        %s285 = scalar_select %p284, %s282, 15
        %p286 = scmp.lt.s32.totalorder %s283, 4
        %s287 = scalar_select %p286, %s283, 4
        %s288 = smul.addr %s285, 5
        %s289 = sadd.s32 %s287, %s288
        %s290 = smul.addr %s289, 4
        %s291 = scalar_lea.vmem %s0, %s290
        %s292 = smul.u32 16, %s28
        %s293 = smul.u32 5, %s30
        %s294 = smul.u32 80, %s30
        %s295 = smul.u32 4, %s29
        %s296 = smul.u32 4, %s29
        %s297 = smul.u32 16, %s28
        %s298 = smul.u32 4, %s29
        %p300 = scmp.eq.s32.totalorder %s30, 0
        // Predicated region
        $region41: #{pallas_linear.1} parent=31 // pred_check
          %p301 = pneg %p300
        $region42: #{pallas_linear.1} parent=31 // pred_check_branch
          %303 = sbr.rel (%p301) target = $region44
        $region43: #{pallas_linear.1} parent=31 // pred_region
          %304 = vst [vmem:[#allocation2] sm:$0xff] 0.0
          %305 = vst [vmem:[#allocation2 + $0x8] sm:$0xff] 0.0
          %306 = vst [vmem:[#allocation2 + $0x10] sm:$0xff] 0.0
          %307 = vst [vmem:[#allocation2 + $0x18] sm:$0xff] 0.0
          %308 = vst [vmem:[#allocation2 + $0x20] sm:$0xff] 0.0
          %309 = vst [vmem:[#allocation2 + $0x28] sm:$0xff] 0.0
          %310 = vst [vmem:[#allocation2 + $0x30] sm:$0xff] 0.0
          %311 = vst [vmem:[#allocation2 + $0x38] sm:$0xff] 0.0
          %312 = vst [vmem:[#allocation2 + $0x40] sm:$0xff] 0.0
          %313 = vst [vmem:[#allocation2 + $0x48] sm:$0xff] 0.0
          %314 = vst [vmem:[#allocation2 + $0x50] sm:$0xff] 0.0
          %315 = vst [vmem:[#allocation2 + $0x58] sm:$0xff] 0.0
          %316 = vst [vmem:[#allocation2 + $0x60] sm:$0xff] 0.0
          %317 = vst [vmem:[#allocation2 + $0x68] sm:$0xff] 0.0
          %318 = vst [vmem:[#allocation2 + $0x70] sm:$0xff] 0.0
          %319 = vst [vmem:[#allocation2 + $0x78] sm:$0xff] 0.0
          %320 = vst [vmem:[#allocation2 + $0x80] sm:$0xff] 0.0
          %321 = vst [vmem:[#allocation2 + $0x88] sm:$0xff] 0.0
          %322 = vst [vmem:[#allocation2 + $0x90] sm:$0xff] 0.0
          %323 = vst [vmem:[#allocation2 + $0x98] sm:$0xff] 0.0
          %324 = vst [vmem:[#allocation2 + $0xa0] sm:$0xff] 0.0
          %325 = vst [vmem:[#allocation2 + $0xa8] sm:$0xff] 0.0
          %326 = vst [vmem:[#allocation2 + $0xb0] sm:$0xff] 0.0
          %327 = vst [vmem:[#allocation2 + $0xb8] sm:$0xff] 0.0
          %328 = vst [vmem:[#allocation2 + $0xc0] sm:$0xff] 0.0
          %329 = vst [vmem:[#allocation2 + $0xc8] sm:$0xff] 0.0
          %330 = vst [vmem:[#allocation2 + $0xd0] sm:$0xff] 0.0
          %331 = vst [vmem:[#allocation2 + $0xd8] sm:$0xff] 0.0
          %332 = vst [vmem:[#allocation2 + $0xe0] sm:$0xff] 0.0
          %333 = vst [vmem:[#allocation2 + $0xe8] sm:$0xff] 0.0
          %334 = vst [vmem:[#allocation2 + $0xf0] sm:$0xff] 0.0
          %335 = vst [vmem:[#allocation2 + $0xf8] sm:$0xff] 0.0
          %336 = vst [vmem:[#allocation2 + $0x100] sm:$0xff] 0.0
          %337 = vst [vmem:[#allocation2 + $0x108] sm:$0xff] 0.0
          %338 = vst [vmem:[#allocation2 + $0x110] sm:$0xff] 0.0
          %339 = vst [vmem:[#allocation2 + $0x118] sm:$0xff] 0.0
          %340 = vst [vmem:[#allocation2 + $0x120] sm:$0xff] 0.0
          %341 = vst [vmem:[#allocation2 + $0x128] sm:$0xff] 0.0
          %342 = vst [vmem:[#allocation2 + $0x130] sm:$0xff] 0.0
          %343 = vst [vmem:[#allocation2 + $0x138] sm:$0xff] 0.0
          %344 = vst [vmem:[#allocation2 + $0x140] sm:$0xff] 0.0
          %345 = vst [vmem:[#allocation2 + $0x148] sm:$0xff] 0.0
          %346 = vst [vmem:[#allocation2 + $0x150] sm:$0xff] 0.0
          %347 = vst [vmem:[#allocation2 + $0x158] sm:$0xff] 0.0
          %348 = vst [vmem:[#allocation2 + $0x160] sm:$0xff] 0.0
          %349 = vst [vmem:[#allocation2 + $0x168] sm:$0xff] 0.0
          %350 = vst [vmem:[#allocation2 + $0x170] sm:$0xff] 0.0
          %351 = vst [vmem:[#allocation2 + $0x178] sm:$0xff] 0.0
          %352 = vst [vmem:[#allocation2 + $0x180] sm:$0xff] 0.0
          %353 = vst [vmem:[#allocation2 + $0x188] sm:$0xff] 0.0
          %354 = vst [vmem:[#allocation2 + $0x190] sm:$0xff] 0.0
          %355 = vst [vmem:[#allocation2 + $0x198] sm:$0xff] 0.0
          %356 = vst [vmem:[#allocation2 + $0x1a0] sm:$0xff] 0.0
          %357 = vst [vmem:[#allocation2 + $0x1a8] sm:$0xff] 0.0
          %358 = vst [vmem:[#allocation2 + $0x1b0] sm:$0xff] 0.0
          %359 = vst [vmem:[#allocation2 + $0x1b8] sm:$0xff] 0.0
          %360 = vst [vmem:[#allocation2 + $0x1c0] sm:$0xff] 0.0
          %361 = vst [vmem:[#allocation2 + $0x1c8] sm:$0xff] 0.0
          %362 = vst [vmem:[#allocation2 + $0x1d0] sm:$0xff] 0.0
          %363 = vst [vmem:[#allocation2 + $0x1d8] sm:$0xff] 0.0
          %364 = vst [vmem:[#allocation2 + $0x1e0] sm:$0xff] 0.0
          %365 = vst [vmem:[#allocation2 + $0x1e8] sm:$0xff] 0.0
          %366 = vst [vmem:[#allocation2 + $0x1f0] sm:$0xff] 0.0
          %367 = vst [vmem:[#allocation2 + $0x1f8] sm:$0xff] 0.0
        $region44: #{pallas_linear.1} parent=31 // pred_fallthru
          _
        %v368 = vld [vmem:[#allocation2] sm:$0xff]
        %v369 = vld [vmem:[#allocation2 + $0x8] sm:$0xff]
        %v370 = vld [vmem:[#allocation2 + $0x10] sm:$0xff]
        %v371 = vld [vmem:[#allocation2 + $0x18] sm:$0xff]
        %v372 = vld [vmem:[#allocation2 + $0x20] sm:$0xff]
        %v373 = vld [vmem:[#allocation2 + $0x28] sm:$0xff]
        %v374 = vld [vmem:[#allocation2 + $0x30] sm:$0xff]
        %v375 = vld [vmem:[#allocation2 + $0x38] sm:$0xff]
        %v376 = vld [vmem:[#allocation2 + $0x40] sm:$0xff]
        %v377 = vld [vmem:[#allocation2 + $0x48] sm:$0xff]
        %v378 = vld [vmem:[#allocation2 + $0x50] sm:$0xff]
        %v379 = vld [vmem:[#allocation2 + $0x58] sm:$0xff]
        %v380 = vld [vmem:[#allocation2 + $0x60] sm:$0xff]
        %v381 = vld [vmem:[#allocation2 + $0x68] sm:$0xff]
        %v382 = vld [vmem:[#allocation2 + $0x70] sm:$0xff]
        %v383 = vld [vmem:[#allocation2 + $0x78] sm:$0xff]
        %v384 = vld [vmem:[#allocation2 + $0x80] sm:$0xff]
        %v385 = vld [vmem:[#allocation2 + $0x88] sm:$0xff]
        %v386 = vld [vmem:[#allocation2 + $0x90] sm:$0xff]
        %v387 = vld [vmem:[#allocation2 + $0x98] sm:$0xff]
        %v388 = vld [vmem:[#allocation2 + $0xa0] sm:$0xff]
        %v389 = vld [vmem:[#allocation2 + $0xa8] sm:$0xff]
        %v390 = vld [vmem:[#allocation2 + $0xb0] sm:$0xff]
        %v391 = vld [vmem:[#allocation2 + $0xb8] sm:$0xff]
        %v392 = vld [vmem:[#allocation2 + $0xc0] sm:$0xff]
        %v393 = vld [vmem:[#allocation2 + $0xc8] sm:$0xff]
        %v394 = vld [vmem:[#allocation2 + $0xd0] sm:$0xff]
        %v395 = vld [vmem:[#allocation2 + $0xd8] sm:$0xff]
        %v396 = vld [vmem:[#allocation2 + $0xe0] sm:$0xff]
        %v397 = vld [vmem:[#allocation2 + $0xe8] sm:$0xff]
        %v398 = vld [vmem:[#allocation2 + $0xf0] sm:$0xff]
        %v399 = vld [vmem:[#allocation2 + $0xf8] sm:$0xff]
        %v400 = vld [vmem:[#allocation2 + $0x100] sm:$0xff]
        %v401 = vld [vmem:[#allocation2 + $0x108] sm:$0xff]
        %v402 = vld [vmem:[#allocation2 + $0x110] sm:$0xff]
        %v403 = vld [vmem:[#allocation2 + $0x118] sm:$0xff]
        %v404 = vld [vmem:[#allocation2 + $0x120] sm:$0xff]
        %v405 = vld [vmem:[#allocation2 + $0x128] sm:$0xff]
        %v406 = vld [vmem:[#allocation2 + $0x130] sm:$0xff]
        %v407 = vld [vmem:[#allocation2 + $0x138] sm:$0xff]
        %v408 = vld [vmem:[#allocation2 + $0x140] sm:$0xff]
        %v409 = vld [vmem:[#allocation2 + $0x148] sm:$0xff]
        %v410 = vld [vmem:[#allocation2 + $0x150] sm:$0xff]
        %v411 = vld [vmem:[#allocation2 + $0x158] sm:$0xff]
        %v412 = vld [vmem:[#allocation2 + $0x160] sm:$0xff]
        %v413 = vld [vmem:[#allocation2 + $0x168] sm:$0xff]
        %v414 = vld [vmem:[#allocation2 + $0x170] sm:$0xff]
        %v415 = vld [vmem:[#allocation2 + $0x178] sm:$0xff]
        %v416 = vld [vmem:[#allocation2 + $0x180] sm:$0xff]
        %v417 = vld [vmem:[#allocation2 + $0x188] sm:$0xff]
        %v418 = vld [vmem:[#allocation2 + $0x190] sm:$0xff]
        %v419 = vld [vmem:[#allocation2 + $0x198] sm:$0xff]
        %v420 = vld [vmem:[#allocation2 + $0x1a0] sm:$0xff]
        %v421 = vld [vmem:[#allocation2 + $0x1a8] sm:$0xff]
        %v422 = vld [vmem:[#allocation2 + $0x1b0] sm:$0xff]
        %v423 = vld [vmem:[#allocation2 + $0x1b8] sm:$0xff]
        %v424 = vld [vmem:[#allocation2 + $0x1c0] sm:$0xff]
        %v425 = vld [vmem:[#allocation2 + $0x1c8] sm:$0xff]
        %v426 = vld [vmem:[#allocation2 + $0x1d0] sm:$0xff]
        %v427 = vld [vmem:[#allocation2 + $0x1d8] sm:$0xff]
        %v428 = vld [vmem:[#allocation2 + $0x1e0] sm:$0xff]
        %v429 = vld [vmem:[#allocation2 + $0x1e8] sm:$0xff]
        %v430 = vld [vmem:[#allocation2 + $0x1f0] sm:$0xff]
        %v431 = vld [vmem:[#allocation2 + $0x1f8] sm:$0xff]
        %v432 = vld [vmem:[%s291] sm:$0xff]
        %v433 = vld [vmem:[%s291 + $0x8] sm:$0xff]
        %v434 = vld [vmem:[%s291 + $0x10] sm:$0xf]
        %v435 = vld [vmem:[%s291 + $0x14] sm:$0xff]
        %v436 = vld [vmem:[%s291 + $0x1c] sm:$0xff]
        %v437 = vld [vmem:[%s291 + $0x24] sm:$0xf]
        %v438 = vld [vmem:[%s291 + $0x28] sm:$0xff]
        %v439 = vld [vmem:[%s291 + $0x30] sm:$0xff]
        %v440 = vld [vmem:[%s291 + $0x38] sm:$0xf]
        %v441 = vld [vmem:[%s291 + $0x3c] sm:$0xff]
        %v442 = vld [vmem:[%s291 + $0x44] sm:$0xff]
        %v443 = vld [vmem:[%s291 + $0x4c] sm:$0xf]
        %v444 = vld [vmem:[%s291 + $0x50] sm:$0xff]
        %v445 = vld [vmem:[%s291 + $0x58] sm:$0xff]
        %v446 = vld [vmem:[%s291 + $0x60] sm:$0xf]
        %v447 = vld [vmem:[%s291 + $0x64] sm:$0xff]
        %v448 = vld [vmem:[%s291 + $0x6c] sm:$0xff]
        %v449 = vld [vmem:[%s291 + $0x74] sm:$0xf]
        %v450 = vld [vmem:[%s291 + $0x78] sm:$0xff]
        %v451 = vld [vmem:[%s291 + $0x80] sm:$0xff]
        %v452 = vld [vmem:[%s291 + $0x88] sm:$0xf]
        %v453 = vld [vmem:[%s291 + $0x8c] sm:$0xff]
        %v454 = vld [vmem:[%s291 + $0x94] sm:$0xff]
        %v455 = vld [vmem:[%s291 + $0x9c] sm:$0xf]
        %v456 = vld [vmem:[%s291 + $0xa0] sm:$0xff]
        %v457 = vld [vmem:[%s291 + $0xa8] sm:$0xff]
        %v458 = vld [vmem:[%s291 + $0xb0] sm:$0xf]
        %v459 = vld [vmem:[%s291 + $0xb4] sm:$0xff]
        %v460 = vld [vmem:[%s291 + $0xbc] sm:$0xff]
        %v461 = vld [vmem:[%s291 + $0xc4] sm:$0xf]
        %v462 = vld [vmem:[%s291 + $0xc8] sm:$0xff]
        %v463 = vld [vmem:[%s291 + $0xd0] sm:$0xff]
        %v464 = vld [vmem:[%s291 + $0xd8] sm:$0xf]
        %v465 = vld [vmem:[%s291 + $0xdc] sm:$0xff]
        %v466 = vld [vmem:[%s291 + $0xe4] sm:$0xff]
        %v467 = vld [vmem:[%s291 + $0xec] sm:$0xf]
        %v468 = vld [vmem:[%s291 + $0xf0] sm:$0xff]
        %v469 = vld [vmem:[%s291 + $0xf8] sm:$0xff]
        %v470 = vld [vmem:[%s291 + $0x100] sm:$0xf]
        %v471 = vld [vmem:[%s291 + $0x104] sm:$0xff]
        %v472 = vld [vmem:[%s291 + $0x10c] sm:$0xff]
        %v473 = vld [vmem:[%s291 + $0x114] sm:$0xf]
        %v474 = vld [vmem:[%s291 + $0x118] sm:$0xff]
        %v475 = vld [vmem:[%s291 + $0x120] sm:$0xff]
        %v476 = vld [vmem:[%s291 + $0x128] sm:$0xf]
        %v477 = vld [vmem:[%s291 + $0x12c] sm:$0xff]
        %v478 = vld [vmem:[%s291 + $0x134] sm:$0xff]
        %v479 = vld [vmem:[%s291 + $0x13c] sm:$0xf]
        %v480 = vld [vmem:[%s235] sm:$0xff]
        %v481 = vld [vmem:[%s235 + $0x8] sm:$0xff]
        %v482 = vld [vmem:[%s235 + $0x10] sm:$0xff]
        %v483 = vld [vmem:[%s235 + $0x18] sm:$0xff]
        %v484 = vld [vmem:[%s235 + $0x20] sm:$0xff]
        %v485 = vld [vmem:[%s235 + $0x28] sm:$0xff]
        %v486 = vld [vmem:[%s235 + $0x30] sm:$0xff]
        %v487 = vld [vmem:[%s235 + $0x38] sm:$0xff]
        %v488 = vld [vmem:[%s235 + $0x40] sm:$0xff]
        %v489 = vld [vmem:[%s235 + $0x48] sm:$0xff]
        %v490 = vld [vmem:[%s235 + $0x50] sm:$0xff]
        %v491 = vld [vmem:[%s235 + $0x58] sm:$0xff]
        %v492 = vld [vmem:[%s235 + $0x60] sm:$0xff]
        %v493 = vld [vmem:[%s235 + $0x68] sm:$0xff]
        %v494 = vld [vmem:[%s235 + $0x70] sm:$0xff]
        %v495 = vld [vmem:[%s235 + $0x78] sm:$0xff]
        %v496 = vld [vmem:[%s235 + $0x80] sm:$0xff]
        %v497 = vld [vmem:[%s235 + $0x88] sm:$0xff]
        %v498 = vld [vmem:[%s235 + $0x90] sm:$0xff]
        %v499 = vld [vmem:[%s235 + $0x98] sm:$0xff]
        %v500 = vld [vmem:[%s235 + $0xa0] sm:$0xff]
        %v501 = vld [vmem:[%s235 + $0xa8] sm:$0xff]
        %v502 = vld [vmem:[%s235 + $0xb0] sm:$0xff]
        %v503 = vld [vmem:[%s235 + $0xb8] sm:$0xff]
        %v504 = vld [vmem:[%s235 + $0xc0] sm:$0xff]
        %v505 = vld [vmem:[%s235 + $0xc8] sm:$0xff]
        %v506 = vld [vmem:[%s235 + $0xd0] sm:$0xff]
        %v507 = vld [vmem:[%s235 + $0xd8] sm:$0xff]
        %v508 = vld [vmem:[%s235 + $0xe0] sm:$0xff]
        %v509 = vld [vmem:[%s235 + $0xe8] sm:$0xff]
        %v510 = vld [vmem:[%s235 + $0xf0] sm:$0xff]
        %v511 = vld [vmem:[%s235 + $0xf8] sm:$0xff]
        %v512 = vld [vmem:[%s235 + $0x100] sm:$0xff]
        %v513 = vld [vmem:[%s235 + $0x108] sm:$0xff]
        %v514 = vld [vmem:[%s235 + $0x110] sm:$0xff]
        %v515 = vld [vmem:[%s235 + $0x118] sm:$0xff]
        %v516 = vld [vmem:[%s235 + $0x120] sm:$0xff]
        %v517 = vld [vmem:[%s235 + $0x128] sm:$0xff]
        %v518 = vld [vmem:[%s235 + $0x130] sm:$0xff]
        %v519 = vld [vmem:[%s235 + $0x138] sm:$0xff]
        %v520 = vld [vmem:[%s235 + $0x140] sm:$0xff]
        %v521 = vld [vmem:[%s235 + $0x148] sm:$0xff]
        %v522 = vld [vmem:[%s235 + $0x150] sm:$0xff]
        %v523 = vld [vmem:[%s235 + $0x158] sm:$0xff]
        %v524 = vld [vmem:[%s235 + $0x160] sm:$0xff]
        %v525 = vld [vmem:[%s235 + $0x168] sm:$0xff]
        %v526 = vld [vmem:[%s235 + $0x170] sm:$0xff]
        %v527 = vld [vmem:[%s235 + $0x178] sm:$0xff]
        %v528 = vld [vmem:[%s235 + $0x180] sm:$0xff]
        %v529 = vld [vmem:[%s235 + $0x188] sm:$0xff]
        %v530 = vld [vmem:[%s235 + $0x190] sm:$0xff]
        %v531 = vld [vmem:[%s235 + $0x198] sm:$0xff]
        %v532 = vld [vmem:[%s235 + $0x1a0] sm:$0xff]
        %v533 = vld [vmem:[%s235 + $0x1a8] sm:$0xff]
        %v534 = vld [vmem:[%s235 + $0x1b0] sm:$0xff]
        %v535 = vld [vmem:[%s235 + $0x1b8] sm:$0xff]
        %v536 = vld [vmem:[%s235 + $0x1c0] sm:$0xff]
        %v537 = vld [vmem:[%s235 + $0x1c8] sm:$0xff]
        %v538 = vld [vmem:[%s235 + $0x1d0] sm:$0xff]
        %v539 = vld [vmem:[%s235 + $0x1d8] sm:$0xff]
        %v540 = vld [vmem:[%s235 + $0x1e0] sm:$0xff]
        %v541 = vld [vmem:[%s235 + $0x1e8] sm:$0xff]
        %v542 = vld [vmem:[%s235 + $0x1f0] sm:$0xff]
        %v543 = vld [vmem:[%s235 + $0x1f8] sm:$0xff]
        %v544 = vld [vmem:[%s235 + $0x200] sm:$0xff]
        %v545 = vld [vmem:[%s235 + $0x208] sm:$0xff]
        %v546 = vld [vmem:[%s235 + $0x210] sm:$0xff]
        %v547 = vld [vmem:[%s235 + $0x218] sm:$0xff]
        %v548 = vld [vmem:[%s235 + $0x220] sm:$0xff]
        %v549 = vld [vmem:[%s235 + $0x228] sm:$0xff]
        %v550 = vld [vmem:[%s235 + $0x230] sm:$0xff]
        %v551 = vld [vmem:[%s235 + $0x238] sm:$0xff]
        %v552 = vld [vmem:[%s235 + $0x240] sm:$0xff]
        %v553 = vld [vmem:[%s235 + $0x248] sm:$0xff]
        %v554 = vld [vmem:[%s235 + $0x250] sm:$0xff]
        %v555 = vld [vmem:[%s235 + $0x258] sm:$0xff]
        %v556 = vld [vmem:[%s235 + $0x260] sm:$0xff]
        %v557 = vld [vmem:[%s235 + $0x268] sm:$0xff]
        %v558 = vld [vmem:[%s235 + $0x270] sm:$0xff]
        %v559 = vld [vmem:[%s235 + $0x278] sm:$0xff]
        %v560 = vld [vmem:[%s235 + $0x280] sm:$0xff]
        %v561 = vld [vmem:[%s235 + $0x288] sm:$0xff]
        %v562 = vld [vmem:[%s235 + $0x290] sm:$0xff]
        %v563 = vld [vmem:[%s235 + $0x298] sm:$0xff]
        %v564 = vld [vmem:[%s235 + $0x2a0] sm:$0xff]
        %v565 = vld [vmem:[%s235 + $0x2a8] sm:$0xff]
        %v566 = vld [vmem:[%s235 + $0x2b0] sm:$0xff]
        %v567 = vld [vmem:[%s235 + $0x2b8] sm:$0xff]
        %v568 = vld [vmem:[%s235 + $0x2c0] sm:$0xff]
        %v569 = vld [vmem:[%s235 + $0x2c8] sm:$0xff]
        %v570 = vld [vmem:[%s235 + $0x2d0] sm:$0xff]
        %v571 = vld [vmem:[%s235 + $0x2d8] sm:$0xff]
        %v572 = vld [vmem:[%s235 + $0x2e0] sm:$0xff]
        %v573 = vld [vmem:[%s235 + $0x2e8] sm:$0xff]
        %v574 = vld [vmem:[%s235 + $0x2f0] sm:$0xff]
        %v575 = vld [vmem:[%s235 + $0x2f8] sm:$0xff]
        %v576 = vld [vmem:[%s235 + $0x300] sm:$0xff]
        %v577 = vld [vmem:[%s235 + $0x308] sm:$0xff]
        %v578 = vld [vmem:[%s235 + $0x310] sm:$0xff]
        %v579 = vld [vmem:[%s235 + $0x318] sm:$0xff]
        %v580 = vld [vmem:[%s235 + $0x320] sm:$0xff]
        %v581 = vld [vmem:[%s235 + $0x328] sm:$0xff]
        %v582 = vld [vmem:[%s235 + $0x330] sm:$0xff]
        %v583 = vld [vmem:[%s235 + $0x338] sm:$0xff]
        %v584 = vld [vmem:[%s235 + $0x340] sm:$0xff]
        %v585 = vld [vmem:[%s235 + $0x348] sm:$0xff]
        %v586 = vld [vmem:[%s235 + $0x350] sm:$0xff]
        %v587 = vld [vmem:[%s235 + $0x358] sm:$0xff]
        %v588 = vld [vmem:[%s235 + $0x360] sm:$0xff]
        %v589 = vld [vmem:[%s235 + $0x368] sm:$0xff]
        %v590 = vld [vmem:[%s235 + $0x370] sm:$0xff]
        %v591 = vld [vmem:[%s235 + $0x378] sm:$0xff]
        %v592 = vld [vmem:[%s235 + $0x380] sm:$0xff]
        %v593 = vld [vmem:[%s235 + $0x388] sm:$0xff]
        %v594 = vld [vmem:[%s235 + $0x390] sm:$0xff]
        %v595 = vld [vmem:[%s235 + $0x398] sm:$0xff]
        %v596 = vld [vmem:[%s235 + $0x3a0] sm:$0xff]
        %v597 = vld [vmem:[%s235 + $0x3a8] sm:$0xff]
        %v598 = vld [vmem:[%s235 + $0x3b0] sm:$0xff]
        %v599 = vld [vmem:[%s235 + $0x3b8] sm:$0xff]
        %v600 = vld [vmem:[%s235 + $0x3c0] sm:$0xff]
        %v601 = vld [vmem:[%s235 + $0x3c8] sm:$0xff]
        %v602 = vld [vmem:[%s235 + $0x3d0] sm:$0xff]
        %v603 = vld [vmem:[%s235 + $0x3d8] sm:$0xff]
        %v604 = vld [vmem:[%s235 + $0x3e0] sm:$0xff]
        %v605 = vld [vmem:[%s235 + $0x3e8] sm:$0xff]
        %v606 = vld [vmem:[%s235 + $0x3f0] sm:$0xff]
        %v607 = vld [vmem:[%s235 + $0x3f8] sm:$0xff]
        %v608 = vld [vmem:[%s235 + $0x400] sm:$0xff]
        %v609 = vld [vmem:[%s235 + $0x408] sm:$0xff]
        %v610 = vld [vmem:[%s235 + $0x410] sm:$0xff]
        %v611 = vld [vmem:[%s235 + $0x418] sm:$0xff]
        %v612 = vld [vmem:[%s235 + $0x420] sm:$0xff]
        %v613 = vld [vmem:[%s235 + $0x428] sm:$0xff]
        %v614 = vld [vmem:[%s235 + $0x430] sm:$0xff]
        %v615 = vld [vmem:[%s235 + $0x438] sm:$0xff]
        %v616 = vld [vmem:[%s235 + $0x440] sm:$0xff]
        %v617 = vld [vmem:[%s235 + $0x448] sm:$0xff]
        %v618 = vld [vmem:[%s235 + $0x450] sm:$0xff]
        %v619 = vld [vmem:[%s235 + $0x458] sm:$0xff]
        %v620 = vld [vmem:[%s235 + $0x460] sm:$0xff]
        %v621 = vld [vmem:[%s235 + $0x468] sm:$0xff]
        %v622 = vld [vmem:[%s235 + $0x470] sm:$0xff]
        %v623 = vld [vmem:[%s235 + $0x478] sm:$0xff]
        %v624 = vld [vmem:[%s235 + $0x480] sm:$0xff]
        %v625 = vld [vmem:[%s235 + $0x488] sm:$0xff]
        %v626 = vld [vmem:[%s235 + $0x490] sm:$0xff]
        %v627 = vld [vmem:[%s235 + $0x498] sm:$0xff]
        %v628 = vld [vmem:[%s235 + $0x4a0] sm:$0xff]
        %v629 = vld [vmem:[%s235 + $0x4a8] sm:$0xff]
        %v630 = vld [vmem:[%s235 + $0x4b0] sm:$0xff]
        %v631 = vld [vmem:[%s235 + $0x4b8] sm:$0xff]
        %v632 = vld [vmem:[%s235 + $0x4c0] sm:$0xff]
        %v633 = vld [vmem:[%s235 + $0x4c8] sm:$0xff]
        %v634 = vld [vmem:[%s235 + $0x4d0] sm:$0xff]
        %v635 = vld [vmem:[%s235 + $0x4d8] sm:$0xff]
        %v636 = vld [vmem:[%s235 + $0x4e0] sm:$0xff]
        %v637 = vld [vmem:[%s235 + $0x4e8] sm:$0xff]
        %v638 = vld [vmem:[%s235 + $0x4f0] sm:$0xff]
        %v639 = vld [vmem:[%s235 + $0x4f8] sm:$0xff]
        %v688 = vunpack.c.l.b16 %v432
        %v689 = vunpack.c.h.b16 %v432
        %v690 = vunpack.c.l.b16 %v433
        %v691 = vunpack.c.h.b16 %v433
        %v692 = vunpack.c.l.b16 %v434
        %v693 = vunpack.c.l.b16 %v435
        %v694 = vunpack.c.h.b16 %v435
        %v695 = vunpack.c.l.b16 %v436
        %v696 = vunpack.c.h.b16 %v436
        %v697 = vunpack.c.l.b16 %v437
        %v698 = vunpack.c.l.b16 %v438
        %v699 = vunpack.c.h.b16 %v438
        %v700 = vunpack.c.l.b16 %v439
        %v701 = vunpack.c.h.b16 %v439
        %v702 = vunpack.c.l.b16 %v440
        %v703 = vunpack.c.l.b16 %v441
        %v704 = vunpack.c.h.b16 %v441
        %v705 = vunpack.c.l.b16 %v442
        %v706 = vunpack.c.h.b16 %v442
        %v707 = vunpack.c.l.b16 %v443
        %v708 = vunpack.c.l.b16 %v444
        %v709 = vunpack.c.h.b16 %v444
        %v710 = vunpack.c.l.b16 %v445
        %v711 = vunpack.c.h.b16 %v445
        %v712 = vunpack.c.l.b16 %v446
        %v713 = vunpack.c.l.b16 %v447
        %v714 = vunpack.c.h.b16 %v447
        %v715 = vunpack.c.l.b16 %v448
        %v716 = vunpack.c.h.b16 %v448
        %v717 = vunpack.c.l.b16 %v449
        %v718 = vunpack.c.l.b16 %v450
        %v719 = vunpack.c.h.b16 %v450
        %v720 = vunpack.c.l.b16 %v451
        %v721 = vunpack.c.h.b16 %v451
        %v722 = vunpack.c.l.b16 %v452
        %v723 = vunpack.c.l.b16 %v453
        %v724 = vunpack.c.h.b16 %v453
        %v725 = vunpack.c.l.b16 %v454
        %v726 = vunpack.c.h.b16 %v454
        %v727 = vunpack.c.l.b16 %v455
        %v728 = vunpack.c.l.b16 %v456
        %v729 = vunpack.c.h.b16 %v456
        %v730 = vunpack.c.l.b16 %v457
        %v731 = vunpack.c.h.b16 %v457
        %v732 = vunpack.c.l.b16 %v458
        %v733 = vunpack.c.l.b16 %v459
        %v734 = vunpack.c.h.b16 %v459
        %v735 = vunpack.c.l.b16 %v460
        %v736 = vunpack.c.h.b16 %v460
        %v737 = vunpack.c.l.b16 %v461
        %v738 = vunpack.c.l.b16 %v462
        %v739 = vunpack.c.h.b16 %v462
        %v740 = vunpack.c.l.b16 %v463
        %v741 = vunpack.c.h.b16 %v463
        %v742 = vunpack.c.l.b16 %v464
        %v743 = vunpack.c.l.b16 %v465
        %v744 = vunpack.c.h.b16 %v465
        %v745 = vunpack.c.l.b16 %v466
        %v746 = vunpack.c.h.b16 %v466
        %v747 = vunpack.c.l.b16 %v467
        %v748 = vunpack.c.l.b16 %v468
        %v749 = vunpack.c.h.b16 %v468
        %v750 = vunpack.c.l.b16 %v469
        %v751 = vunpack.c.h.b16 %v469
        %v752 = vunpack.c.l.b16 %v470
        %v753 = vunpack.c.l.b16 %v471
        %v754 = vunpack.c.h.b16 %v471
        %v755 = vunpack.c.l.b16 %v472
        %v756 = vunpack.c.h.b16 %v472
        %v757 = vunpack.c.l.b16 %v473
        %v758 = vunpack.c.l.b16 %v474
        %v759 = vunpack.c.h.b16 %v474
        %v760 = vunpack.c.l.b16 %v475
        %v761 = vunpack.c.h.b16 %v475
        %v762 = vunpack.c.l.b16 %v476
        %v763 = vunpack.c.l.b16 %v477
        %v764 = vunpack.c.h.b16 %v477
        %v765 = vunpack.c.l.b16 %v478
        %v766 = vunpack.c.h.b16 %v478
        %v767 = vunpack.c.l.b16 %v479
        %v768 = vpack.c.b16 %v693, %v688
        %v769 = vpack.c.b16 %v694, %v689
        %v770 = vpack.c.b16 %v695, %v690
        %v771 = vpack.c.b16 %v696, %v691
        %v772 = vpack.c.b16 %v697, %v692
        %v773 = vpack.c.b16 %v703, %v698
        %v774 = vpack.c.b16 %v704, %v699
        %v775 = vpack.c.b16 %v705, %v700
        %v776 = vpack.c.b16 %v706, %v701
        %v777 = vpack.c.b16 %v707, %v702
        %v778 = vpack.c.b16 %v713, %v708
        %v779 = vpack.c.b16 %v714, %v709
        %v780 = vpack.c.b16 %v715, %v710
        %v781 = vpack.c.b16 %v716, %v711
        %v782 = vpack.c.b16 %v717, %v712
        %v783 = vpack.c.b16 %v723, %v718
        %v784 = vpack.c.b16 %v724, %v719
        %v785 = vpack.c.b16 %v725, %v720
        %v786 = vpack.c.b16 %v726, %v721
        %v787 = vpack.c.b16 %v727, %v722
        %v788 = vpack.c.b16 %v733, %v728
        %v789 = vpack.c.b16 %v734, %v729
        %v790 = vpack.c.b16 %v735, %v730
        %v791 = vpack.c.b16 %v736, %v731
        %v792 = vpack.c.b16 %v737, %v732
        %v793 = vpack.c.b16 %v743, %v738
        %v794 = vpack.c.b16 %v744, %v739
        %v795 = vpack.c.b16 %v745, %v740
        %v796 = vpack.c.b16 %v746, %v741
        %v797 = vpack.c.b16 %v747, %v742
        %v798 = vpack.c.b16 %v753, %v748
        %v799 = vpack.c.b16 %v754, %v749
        %v800 = vpack.c.b16 %v755, %v750
        %v801 = vpack.c.b16 %v756, %v751
        %v802 = vpack.c.b16 %v757, %v752
        %v803 = vpack.c.b16 %v763, %v758
        %v804 = vpack.c.b16 %v764, %v759
        %v805 = vpack.c.b16 %v765, %v760
        %v806 = vpack.c.b16 %v766, %v761
        %v807 = vpack.c.b16 %v767, %v762
        %v1008 = vunpack.c.l.b16 %v480
        %v1009 = vunpack.c.h.b16 %v480
        %v1010 = vunpack.c.l.b16 %v481
        %v1011 = vunpack.c.h.b16 %v481
        %v1012 = vunpack.c.l.b16 %v482
        %v1013 = vunpack.c.h.b16 %v482
        %v1014 = vunpack.c.l.b16 %v483
        %v1015 = vunpack.c.h.b16 %v483
        %v1016 = vunpack.c.l.b16 %v484
        %v1017 = vunpack.c.h.b16 %v484
        %v1018 = vunpack.c.l.b16 %v485
        %v1019 = vunpack.c.h.b16 %v485
        %v1020 = vunpack.c.l.b16 %v486
        %v1021 = vunpack.c.h.b16 %v486
        %v1022 = vunpack.c.l.b16 %v487
        %v1023 = vunpack.c.h.b16 %v487
        %v1024 = vunpack.c.l.b16 %v488
        %v1025 = vunpack.c.h.b16 %v488
        %v1026 = vunpack.c.l.b16 %v489
        %v1027 = vunpack.c.h.b16 %v489
        %v1028 = vunpack.c.l.b16 %v490
        %v1029 = vunpack.c.h.b16 %v490
        %v1030 = vunpack.c.l.b16 %v491
        %v1031 = vunpack.c.h.b16 %v491
        %v1032 = vunpack.c.l.b16 %v492
        %v1033 = vunpack.c.h.b16 %v492
        %v1034 = vunpack.c.l.b16 %v493
        %v1035 = vunpack.c.h.b16 %v493
        %v1036 = vunpack.c.l.b16 %v494
        %v1037 = vunpack.c.h.b16 %v494
        %v1038 = vunpack.c.l.b16 %v495
        %v1039 = vunpack.c.h.b16 %v495
        %v1040 = vunpack.c.l.b16 %v496
        %v1041 = vunpack.c.h.b16 %v496
        %v1042 = vunpack.c.l.b16 %v497
        %v1043 = vunpack.c.h.b16 %v497
        %v1044 = vunpack.c.l.b16 %v498
        %v1045 = vunpack.c.h.b16 %v498
        %v1046 = vunpack.c.l.b16 %v499
        %v1047 = vunpack.c.h.b16 %v499
        %v1048 = vunpack.c.l.b16 %v500
        %v1049 = vunpack.c.h.b16 %v500
        %v1050 = vunpack.c.l.b16 %v501
        %v1051 = vunpack.c.h.b16 %v501
        %v1052 = vunpack.c.l.b16 %v502
        %v1053 = vunpack.c.h.b16 %v502
        %v1054 = vunpack.c.l.b16 %v503
        %v1055 = vunpack.c.h.b16 %v503
        %v1056 = vunpack.c.l.b16 %v504
        %v1057 = vunpack.c.h.b16 %v504
        %v1058 = vunpack.c.l.b16 %v505
        %v1059 = vunpack.c.h.b16 %v505
        %v1060 = vunpack.c.l.b16 %v506
        %v1061 = vunpack.c.h.b16 %v506
        %v1062 = vunpack.c.l.b16 %v507
        %v1063 = vunpack.c.h.b16 %v507
        %v1064 = vunpack.c.l.b16 %v508
        %v1065 = vunpack.c.h.b16 %v508
        %v1066 = vunpack.c.l.b16 %v509
        %v1067 = vunpack.c.h.b16 %v509
        %v1068 = vunpack.c.l.b16 %v510
        %v1069 = vunpack.c.h.b16 %v510
        %v1070 = vunpack.c.l.b16 %v511
        %v1071 = vunpack.c.h.b16 %v511
        %v1072 = vunpack.c.l.b16 %v512
        %v1073 = vunpack.c.h.b16 %v512
        %v1074 = vunpack.c.l.b16 %v513
        %v1075 = vunpack.c.h.b16 %v513
        %v1076 = vunpack.c.l.b16 %v514
        %v1077 = vunpack.c.h.b16 %v514
        %v1078 = vunpack.c.l.b16 %v515
        %v1079 = vunpack.c.h.b16 %v515
        %v1080 = vunpack.c.l.b16 %v516
        %v1081 = vunpack.c.h.b16 %v516
        %v1082 = vunpack.c.l.b16 %v517
        %v1083 = vunpack.c.h.b16 %v517
        %v1084 = vunpack.c.l.b16 %v518
        %v1085 = vunpack.c.h.b16 %v518
        %v1086 = vunpack.c.l.b16 %v519
        %v1087 = vunpack.c.h.b16 %v519
        %v1088 = vunpack.c.l.b16 %v520
        %v1089 = vunpack.c.h.b16 %v520
        %v1090 = vunpack.c.l.b16 %v521
        %v1091 = vunpack.c.h.b16 %v521
        %v1092 = vunpack.c.l.b16 %v522
        %v1093 = vunpack.c.h.b16 %v522
        %v1094 = vunpack.c.l.b16 %v523
        %v1095 = vunpack.c.h.b16 %v523
        %v1096 = vunpack.c.l.b16 %v524
        %v1097 = vunpack.c.h.b16 %v524
        %v1098 = vunpack.c.l.b16 %v525
        %v1099 = vunpack.c.h.b16 %v525
        %v1100 = vunpack.c.l.b16 %v526
        %v1101 = vunpack.c.h.b16 %v526
        %v1102 = vunpack.c.l.b16 %v527
        %v1103 = vunpack.c.h.b16 %v527
        %v1104 = vunpack.c.l.b16 %v528
        %v1105 = vunpack.c.h.b16 %v528
        %v1106 = vunpack.c.l.b16 %v529
        %v1107 = vunpack.c.h.b16 %v529
        %v1108 = vunpack.c.l.b16 %v530
        %v1109 = vunpack.c.h.b16 %v530
        %v1110 = vunpack.c.l.b16 %v531
        %v1111 = vunpack.c.h.b16 %v531
        %v1112 = vunpack.c.l.b16 %v532
        %v1113 = vunpack.c.h.b16 %v532
        %v1114 = vunpack.c.l.b16 %v533
        %v1115 = vunpack.c.h.b16 %v533
        %v1116 = vunpack.c.l.b16 %v534
        %v1117 = vunpack.c.h.b16 %v534
        %v1118 = vunpack.c.l.b16 %v535
        %v1119 = vunpack.c.h.b16 %v535
        %v1120 = vunpack.c.l.b16 %v536
        %v1121 = vunpack.c.h.b16 %v536
        %v1122 = vunpack.c.l.b16 %v537
        %v1123 = vunpack.c.h.b16 %v537
        %v1124 = vunpack.c.l.b16 %v538
        %v1125 = vunpack.c.h.b16 %v538
        %v1126 = vunpack.c.l.b16 %v539
        %v1127 = vunpack.c.h.b16 %v539
        %v1128 = vunpack.c.l.b16 %v540
        %v1129 = vunpack.c.h.b16 %v540
        %v1130 = vunpack.c.l.b16 %v541
        %v1131 = vunpack.c.h.b16 %v541
        %v1132 = vunpack.c.l.b16 %v542
        %v1133 = vunpack.c.h.b16 %v542
        %v1134 = vunpack.c.l.b16 %v543
        %v1135 = vunpack.c.h.b16 %v543
        %v1136 = vunpack.c.l.b16 %v544
        %v1137 = vunpack.c.h.b16 %v544
        %v1138 = vunpack.c.l.b16 %v545
        %v1139 = vunpack.c.h.b16 %v545
        %v1140 = vunpack.c.l.b16 %v546
        %v1141 = vunpack.c.h.b16 %v546
        %v1142 = vunpack.c.l.b16 %v547
        %v1143 = vunpack.c.h.b16 %v547
        %v1144 = vunpack.c.l.b16 %v548
        %v1145 = vunpack.c.h.b16 %v548
        %v1146 = vunpack.c.l.b16 %v549
        %v1147 = vunpack.c.h.b16 %v549
        %v1148 = vunpack.c.l.b16 %v550
        %v1149 = vunpack.c.h.b16 %v550
        %v1150 = vunpack.c.l.b16 %v551
        %v1151 = vunpack.c.h.b16 %v551
        %v1152 = vunpack.c.l.b16 %v552
        %v1153 = vunpack.c.h.b16 %v552
        %v1154 = vunpack.c.l.b16 %v553
        %v1155 = vunpack.c.h.b16 %v553
        %v1156 = vunpack.c.l.b16 %v554
        %v1157 = vunpack.c.h.b16 %v554
        %v1158 = vunpack.c.l.b16 %v555
        %v1159 = vunpack.c.h.b16 %v555
        %v1160 = vunpack.c.l.b16 %v556
        %v1161 = vunpack.c.h.b16 %v556
        %v1162 = vunpack.c.l.b16 %v557
        %v1163 = vunpack.c.h.b16 %v557
        %v1164 = vunpack.c.l.b16 %v558
        %v1165 = vunpack.c.h.b16 %v558
        %v1166 = vunpack.c.l.b16 %v559
        %v1167 = vunpack.c.h.b16 %v559
        %v1168 = vunpack.c.l.b16 %v560
        %v1169 = vunpack.c.h.b16 %v560
        %v1170 = vunpack.c.l.b16 %v561
        %v1171 = vunpack.c.h.b16 %v561
        %v1172 = vunpack.c.l.b16 %v562
        %v1173 = vunpack.c.h.b16 %v562
        %v1174 = vunpack.c.l.b16 %v563
        %v1175 = vunpack.c.h.b16 %v563
        %v1176 = vunpack.c.l.b16 %v564
        %v1177 = vunpack.c.h.b16 %v564
        %v1178 = vunpack.c.l.b16 %v565
        %v1179 = vunpack.c.h.b16 %v565
        %v1180 = vunpack.c.l.b16 %v566
        %v1181 = vunpack.c.h.b16 %v566
        %v1182 = vunpack.c.l.b16 %v567
        %v1183 = vunpack.c.h.b16 %v567
        %v1184 = vunpack.c.l.b16 %v568
        %v1185 = vunpack.c.h.b16 %v568
        %v1186 = vunpack.c.l.b16 %v569
        %v1187 = vunpack.c.h.b16 %v569
        %v1188 = vunpack.c.l.b16 %v570
        %v1189 = vunpack.c.h.b16 %v570
        %v1190 = vunpack.c.l.b16 %v571
        %v1191 = vunpack.c.h.b16 %v571
        %v1192 = vunpack.c.l.b16 %v572
        %v1193 = vunpack.c.h.b16 %v572
        %v1194 = vunpack.c.l.b16 %v573
        %v1195 = vunpack.c.h.b16 %v573
        %v1196 = vunpack.c.l.b16 %v574
        %v1197 = vunpack.c.h.b16 %v574
        %v1198 = vunpack.c.l.b16 %v575
        %v1199 = vunpack.c.h.b16 %v575
        %v1200 = vunpack.c.l.b16 %v576
        %v1201 = vunpack.c.h.b16 %v576
        %v1202 = vunpack.c.l.b16 %v577
        %v1203 = vunpack.c.h.b16 %v577
        %v1204 = vunpack.c.l.b16 %v578
        %v1205 = vunpack.c.h.b16 %v578
        %v1206 = vunpack.c.l.b16 %v579
        %v1207 = vunpack.c.h.b16 %v579
        %v1208 = vunpack.c.l.b16 %v580
        %v1209 = vunpack.c.h.b16 %v580
        %v1210 = vunpack.c.l.b16 %v581
        %v1211 = vunpack.c.h.b16 %v581
        %v1212 = vunpack.c.l.b16 %v582
        %v1213 = vunpack.c.h.b16 %v582
        %v1214 = vunpack.c.l.b16 %v583
        %v1215 = vunpack.c.h.b16 %v583
        %v1216 = vunpack.c.l.b16 %v584
        %v1217 = vunpack.c.h.b16 %v584
        %v1218 = vunpack.c.l.b16 %v585
        %v1219 = vunpack.c.h.b16 %v585
        %v1220 = vunpack.c.l.b16 %v586
        %v1221 = vunpack.c.h.b16 %v586
        %v1222 = vunpack.c.l.b16 %v587
        %v1223 = vunpack.c.h.b16 %v587
        %v1224 = vunpack.c.l.b16 %v588
        %v1225 = vunpack.c.h.b16 %v588
        %v1226 = vunpack.c.l.b16 %v589
        %v1227 = vunpack.c.h.b16 %v589
        %v1228 = vunpack.c.l.b16 %v590
        %v1229 = vunpack.c.h.b16 %v590
        %v1230 = vunpack.c.l.b16 %v591
        %v1231 = vunpack.c.h.b16 %v591
        %v1232 = vunpack.c.l.b16 %v592
        %v1233 = vunpack.c.h.b16 %v592
        %v1234 = vunpack.c.l.b16 %v593
        %v1235 = vunpack.c.h.b16 %v593
        %v1236 = vunpack.c.l.b16 %v594
        %v1237 = vunpack.c.h.b16 %v594
        %v1238 = vunpack.c.l.b16 %v595
        %v1239 = vunpack.c.h.b16 %v595
        %v1240 = vunpack.c.l.b16 %v596
        %v1241 = vunpack.c.h.b16 %v596
        %v1242 = vunpack.c.l.b16 %v597
        %v1243 = vunpack.c.h.b16 %v597
        %v1244 = vunpack.c.l.b16 %v598
        %v1245 = vunpack.c.h.b16 %v598
        %v1246 = vunpack.c.l.b16 %v599
        %v1247 = vunpack.c.h.b16 %v599
        %v1248 = vunpack.c.l.b16 %v600
        %v1249 = vunpack.c.h.b16 %v600
        %v1250 = vunpack.c.l.b16 %v601
        %v1251 = vunpack.c.h.b16 %v601
        %v1252 = vunpack.c.l.b16 %v602
        %v1253 = vunpack.c.h.b16 %v602
        %v1254 = vunpack.c.l.b16 %v603
        %v1255 = vunpack.c.h.b16 %v603
        %v1256 = vunpack.c.l.b16 %v604
        %v1257 = vunpack.c.h.b16 %v604
        %v1258 = vunpack.c.l.b16 %v605
        %v1259 = vunpack.c.h.b16 %v605
        %v1260 = vunpack.c.l.b16 %v606
        %v1261 = vunpack.c.h.b16 %v606
        %v1262 = vunpack.c.l.b16 %v607
        %v1263 = vunpack.c.h.b16 %v607
        %v1264 = vunpack.c.l.b16 %v608
        %v1265 = vunpack.c.h.b16 %v608
        %v1266 = vunpack.c.l.b16 %v609
        %v1267 = vunpack.c.h.b16 %v609
        %v1268 = vunpack.c.l.b16 %v610
        %v1269 = vunpack.c.h.b16 %v610
        %v1270 = vunpack.c.l.b16 %v611
        %v1271 = vunpack.c.h.b16 %v611
        %v1272 = vunpack.c.l.b16 %v612
        %v1273 = vunpack.c.h.b16 %v612
        %v1274 = vunpack.c.l.b16 %v613
        %v1275 = vunpack.c.h.b16 %v613
        %v1276 = vunpack.c.l.b16 %v614
        %v1277 = vunpack.c.h.b16 %v614
        %v1278 = vunpack.c.l.b16 %v615
        %v1279 = vunpack.c.h.b16 %v615
        %v1280 = vunpack.c.l.b16 %v616
        %v1281 = vunpack.c.h.b16 %v616
        %v1282 = vunpack.c.l.b16 %v617
        %v1283 = vunpack.c.h.b16 %v617
        %v1284 = vunpack.c.l.b16 %v618
        %v1285 = vunpack.c.h.b16 %v618
        %v1286 = vunpack.c.l.b16 %v619
        %v1287 = vunpack.c.h.b16 %v619
        %v1288 = vunpack.c.l.b16 %v620
        %v1289 = vunpack.c.h.b16 %v620
        %v1290 = vunpack.c.l.b16 %v621
        %v1291 = vunpack.c.h.b16 %v621
        %v1292 = vunpack.c.l.b16 %v622
        %v1293 = vunpack.c.h.b16 %v622
        %v1294 = vunpack.c.l.b16 %v623
        %v1295 = vunpack.c.h.b16 %v623
        %v1296 = vunpack.c.l.b16 %v624
        %v1297 = vunpack.c.h.b16 %v624
        %v1298 = vunpack.c.l.b16 %v625
        %v1299 = vunpack.c.h.b16 %v625
        %v1300 = vunpack.c.l.b16 %v626
        %v1301 = vunpack.c.h.b16 %v626
        %v1302 = vunpack.c.l.b16 %v627
        %v1303 = vunpack.c.h.b16 %v627
        %v1304 = vunpack.c.l.b16 %v628
        %v1305 = vunpack.c.h.b16 %v628
        %v1306 = vunpack.c.l.b16 %v629
        %v1307 = vunpack.c.h.b16 %v629
        %v1308 = vunpack.c.l.b16 %v630
        %v1309 = vunpack.c.h.b16 %v630
        %v1310 = vunpack.c.l.b16 %v631
        %v1311 = vunpack.c.h.b16 %v631
        %v1312 = vunpack.c.l.b16 %v632
        %v1313 = vunpack.c.h.b16 %v632
        %v1314 = vunpack.c.l.b16 %v633
        %v1315 = vunpack.c.h.b16 %v633
        %v1316 = vunpack.c.l.b16 %v634
        %v1317 = vunpack.c.h.b16 %v634
        %v1318 = vunpack.c.l.b16 %v635
        %v1319 = vunpack.c.h.b16 %v635
        %v1320 = vunpack.c.l.b16 %v636
        %v1321 = vunpack.c.h.b16 %v636
        %v1322 = vunpack.c.l.b16 %v637
        %v1323 = vunpack.c.h.b16 %v637
        %v1324 = vunpack.c.l.b16 %v638
        %v1325 = vunpack.c.h.b16 %v638
        %v1326 = vunpack.c.l.b16 %v639
        %v1327 = vunpack.c.h.b16 %v639
        %v1328 = vpack.c.b16 %v1012, %v1008
        %v1329 = vpack.c.b16 %v1013, %v1009
        %v1330 = vpack.c.b16 %v1014, %v1010
        %v1331 = vpack.c.b16 %v1015, %v1011
        %v1332 = vpack.c.b16 %v1020, %v1016
        %v1333 = vpack.c.b16 %v1021, %v1017
        %v1334 = vpack.c.b16 %v1022, %v1018
        %v1335 = vpack.c.b16 %v1023, %v1019
        %v1336 = vpack.c.b16 %v1028, %v1024
        %v1337 = vpack.c.b16 %v1029, %v1025
        %v1338 = vpack.c.b16 %v1030, %v1026
        %v1339 = vpack.c.b16 %v1031, %v1027
        %v1340 = vpack.c.b16 %v1036, %v1032
        %v1341 = vpack.c.b16 %v1037, %v1033
        %v1342 = vpack.c.b16 %v1038, %v1034
        %v1343 = vpack.c.b16 %v1039, %v1035
        %v1344 = vpack.c.b16 %v1044, %v1040
        %v1345 = vpack.c.b16 %v1045, %v1041
        %v1346 = vpack.c.b16 %v1046, %v1042
        %v1347 = vpack.c.b16 %v1047, %v1043
        %v1348 = vpack.c.b16 %v1052, %v1048
        %v1349 = vpack.c.b16 %v1053, %v1049
        %v1350 = vpack.c.b16 %v1054, %v1050
        %v1351 = vpack.c.b16 %v1055, %v1051
        %v1352 = vpack.c.b16 %v1060, %v1056
        %v1353 = vpack.c.b16 %v1061, %v1057
        %v1354 = vpack.c.b16 %v1062, %v1058
        %v1355 = vpack.c.b16 %v1063, %v1059
        %v1356 = vpack.c.b16 %v1068, %v1064
        %v1357 = vpack.c.b16 %v1069, %v1065
        %v1358 = vpack.c.b16 %v1070, %v1066
        %v1359 = vpack.c.b16 %v1071, %v1067
        %v1360 = vpack.c.b16 %v1076, %v1072
        %v1361 = vpack.c.b16 %v1077, %v1073
        %v1362 = vpack.c.b16 %v1078, %v1074
        %v1363 = vpack.c.b16 %v1079, %v1075
        %v1364 = vpack.c.b16 %v1084, %v1080
        %v1365 = vpack.c.b16 %v1085, %v1081
        %v1366 = vpack.c.b16 %v1086, %v1082
        %v1367 = vpack.c.b16 %v1087, %v1083
        %v1368 = vpack.c.b16 %v1092, %v1088
        %v1369 = vpack.c.b16 %v1093, %v1089
        %v1370 = vpack.c.b16 %v1094, %v1090
        %v1371 = vpack.c.b16 %v1095, %v1091
        %v1372 = vpack.c.b16 %v1100, %v1096
        %v1373 = vpack.c.b16 %v1101, %v1097
        %v1374 = vpack.c.b16 %v1102, %v1098
        %v1375 = vpack.c.b16 %v1103, %v1099
        %v1376 = vpack.c.b16 %v1108, %v1104
        %v1377 = vpack.c.b16 %v1109, %v1105
        %v1378 = vpack.c.b16 %v1110, %v1106
        %v1379 = vpack.c.b16 %v1111, %v1107
        %v1380 = vpack.c.b16 %v1116, %v1112
        %v1381 = vpack.c.b16 %v1117, %v1113
        %v1382 = vpack.c.b16 %v1118, %v1114
        %v1383 = vpack.c.b16 %v1119, %v1115
        %v1384 = vpack.c.b16 %v1124, %v1120
        %v1385 = vpack.c.b16 %v1125, %v1121
        %v1386 = vpack.c.b16 %v1126, %v1122
        %v1387 = vpack.c.b16 %v1127, %v1123
        %v1388 = vpack.c.b16 %v1132, %v1128
        %v1389 = vpack.c.b16 %v1133, %v1129
        %v1390 = vpack.c.b16 %v1134, %v1130
        %v1391 = vpack.c.b16 %v1135, %v1131
        %v1392 = vpack.c.b16 %v1140, %v1136
        %v1393 = vpack.c.b16 %v1141, %v1137
        %v1394 = vpack.c.b16 %v1142, %v1138
        %v1395 = vpack.c.b16 %v1143, %v1139
        %v1396 = vpack.c.b16 %v1148, %v1144
        %v1397 = vpack.c.b16 %v1149, %v1145
        %v1398 = vpack.c.b16 %v1150, %v1146
        %v1399 = vpack.c.b16 %v1151, %v1147
        %v1400 = vpack.c.b16 %v1156, %v1152
        %v1401 = vpack.c.b16 %v1157, %v1153
        %v1402 = vpack.c.b16 %v1158, %v1154
        %v1403 = vpack.c.b16 %v1159, %v1155
        %v1404 = vpack.c.b16 %v1164, %v1160
        %v1405 = vpack.c.b16 %v1165, %v1161
        %v1406 = vpack.c.b16 %v1166, %v1162
        %v1407 = vpack.c.b16 %v1167, %v1163
        %v1408 = vpack.c.b16 %v1172, %v1168
        %v1409 = vpack.c.b16 %v1173, %v1169
        %v1410 = vpack.c.b16 %v1174, %v1170
        %v1411 = vpack.c.b16 %v1175, %v1171
        %v1412 = vpack.c.b16 %v1180, %v1176
        %v1413 = vpack.c.b16 %v1181, %v1177
        %v1414 = vpack.c.b16 %v1182, %v1178
        %v1415 = vpack.c.b16 %v1183, %v1179
        %v1416 = vpack.c.b16 %v1188, %v1184
        %v1417 = vpack.c.b16 %v1189, %v1185
        %v1418 = vpack.c.b16 %v1190, %v1186
        %v1419 = vpack.c.b16 %v1191, %v1187
        %v1420 = vpack.c.b16 %v1196, %v1192
        %v1421 = vpack.c.b16 %v1197, %v1193
        %v1422 = vpack.c.b16 %v1198, %v1194
        %v1423 = vpack.c.b16 %v1199, %v1195
        %v1424 = vpack.c.b16 %v1204, %v1200
        %v1425 = vpack.c.b16 %v1205, %v1201
        %v1426 = vpack.c.b16 %v1206, %v1202
        %v1427 = vpack.c.b16 %v1207, %v1203
        %v1428 = vpack.c.b16 %v1212, %v1208
        %v1429 = vpack.c.b16 %v1213, %v1209
        %v1430 = vpack.c.b16 %v1214, %v1210
        %v1431 = vpack.c.b16 %v1215, %v1211
        %v1432 = vpack.c.b16 %v1220, %v1216
        %v1433 = vpack.c.b16 %v1221, %v1217
        %v1434 = vpack.c.b16 %v1222, %v1218
        %v1435 = vpack.c.b16 %v1223, %v1219
        %v1436 = vpack.c.b16 %v1228, %v1224
        %v1437 = vpack.c.b16 %v1229, %v1225
        %v1438 = vpack.c.b16 %v1230, %v1226
        %v1439 = vpack.c.b16 %v1231, %v1227
        %v1440 = vpack.c.b16 %v1236, %v1232
        %v1441 = vpack.c.b16 %v1237, %v1233
        %v1442 = vpack.c.b16 %v1238, %v1234
        %v1443 = vpack.c.b16 %v1239, %v1235
        %v1444 = vpack.c.b16 %v1244, %v1240
        %v1445 = vpack.c.b16 %v1245, %v1241
        %v1446 = vpack.c.b16 %v1246, %v1242
        %v1447 = vpack.c.b16 %v1247, %v1243
        %v1448 = vpack.c.b16 %v1252, %v1248
        %v1449 = vpack.c.b16 %v1253, %v1249
        %v1450 = vpack.c.b16 %v1254, %v1250
        %v1451 = vpack.c.b16 %v1255, %v1251
        %v1452 = vpack.c.b16 %v1260, %v1256
        %v1453 = vpack.c.b16 %v1261, %v1257
        %v1454 = vpack.c.b16 %v1262, %v1258
        %v1455 = vpack.c.b16 %v1263, %v1259
        %v1456 = vpack.c.b16 %v1268, %v1264
        %v1457 = vpack.c.b16 %v1269, %v1265
        %v1458 = vpack.c.b16 %v1270, %v1266
        %v1459 = vpack.c.b16 %v1271, %v1267
        %v1460 = vpack.c.b16 %v1276, %v1272
        %v1461 = vpack.c.b16 %v1277, %v1273
        %v1462 = vpack.c.b16 %v1278, %v1274
        %v1463 = vpack.c.b16 %v1279, %v1275
        %v1464 = vpack.c.b16 %v1284, %v1280
        %v1465 = vpack.c.b16 %v1285, %v1281
        %v1466 = vpack.c.b16 %v1286, %v1282
        %v1467 = vpack.c.b16 %v1287, %v1283
        %v1468 = vpack.c.b16 %v1292, %v1288
        %v1469 = vpack.c.b16 %v1293, %v1289
        %v1470 = vpack.c.b16 %v1294, %v1290
        %v1471 = vpack.c.b16 %v1295, %v1291
        %v1472 = vpack.c.b16 %v1300, %v1296
        %v1473 = vpack.c.b16 %v1301, %v1297
        %v1474 = vpack.c.b16 %v1302, %v1298
        %v1475 = vpack.c.b16 %v1303, %v1299
        %v1476 = vpack.c.b16 %v1308, %v1304
        %v1477 = vpack.c.b16 %v1309, %v1305
        %v1478 = vpack.c.b16 %v1310, %v1306
        %v1479 = vpack.c.b16 %v1311, %v1307
        %v1480 = vpack.c.b16 %v1316, %v1312
        %v1481 = vpack.c.b16 %v1317, %v1313
        %v1482 = vpack.c.b16 %v1318, %v1314
        %v1483 = vpack.c.b16 %v1319, %v1315
        %v1484 = vpack.c.b16 %v1324, %v1320
        %v1485 = vpack.c.b16 %v1325, %v1321
        %v1486 = vpack.c.b16 %v1326, %v1322
        %v1487 = vpack.c.b16 %v1327, %v1323
        %1648 = vmatprep.subr.bf16.mxu0 %v1329
        %1649 = vmatpush1.bf16.msra.mxu0 %v1328
        %1650 = vmatprep.subr.bf16.mxu0 %v1333
        %1651 = vmatpush1.bf16.msra.mxu0 %v1332
        %1652 = vmatprep.subr.bf16.mxu0 %v1337
        %1653 = vmatpush1.bf16.msra.mxu0 %v1336
        %1654 = vmatprep.subr.bf16.mxu0 %v1341
        %1655 = vmatpush1.bf16.msra.mxu0 %v1340
        %1656 = vmatprep.subr.bf16.mxu0 %v1345
        %1657 = vmatpush1.bf16.msra.mxu0 %v1344
        %1658 = vmatprep.subr.bf16.mxu0 %v1349
        %1659 = vmatpush1.bf16.msra.mxu0 %v1348
        %1660 = vmatprep.subr.bf16.mxu0 %v1353
        %1661 = vmatpush1.bf16.msra.mxu0 %v1352
        %1662 = vmatprep.subr.bf16.mxu0 %v1357
        %1663 = vmatpush1.bf16.msra.mxu0 %v1356
        %1664 = vmatprep.subr.bf16.mxu0 %v1361
        %1665 = vmatpush1.bf16.msra.mxu0 %v1360
        %1666 = vmatprep.subr.bf16.mxu0 %v1365
        %1667 = vmatpush1.bf16.msra.mxu0 %v1364
        %1668 = vmatprep.subr.bf16.mxu0 %v1369
        %1669 = vmatpush1.bf16.msra.mxu0 %v1368
        %1670 = vmatprep.subr.bf16.mxu0 %v1373
        %1671 = vmatpush1.bf16.msra.mxu0 %v1372
        %1672 = vmatprep.subr.bf16.mxu0 %v1377
        %1673 = vmatpush1.bf16.msra.mxu0 %v1376
        %1674 = vmatprep.subr.bf16.mxu0 %v1381
        %1675 = vmatpush1.bf16.msra.mxu0 %v1380
        %1676 = vmatprep.subr.bf16.mxu0 %v1385
        %1677 = vmatpush1.bf16.msra.mxu0 %v1384
        %1678 = vmatprep.subr.bf16.mxu0 %v1389
        %1679 = vmatpush1.bf16.msra.mxu0 %v1388
        %1680 = vmatprep.mubr.bf16.mxu0 %v769
        %1681 = vmatmul.mubr.bf16.gmra.mrb[0].mxu0 %v768
        %v1682 = vpop.f32.mrb[0].mxu0
        %v1683 = vadd.f32 0.0, %v1682
        %v1684 = vpop.f32.mrb[0].mxu0
        %v1685 = vadd.f32 0.0, %v1684
        %v1686 = vpop.f32.mrb[0].mxu0
        %v1687 = vadd.f32 0.0, %v1686
        %v1688 = vpop.f32.mrb[0].mxu0
        %v1689 = vadd.f32 0.0, %v1688
        %1690 = vmatprep.mubr.bf16.mxu0 %v774
        %1691 = vmatmul.mubr.bf16.gmra.mrb[0].mxu0 %v773
        %v1692 = vpop.f32.mrb[0].mxu0
        %v1693 = vadd.f32 0.0, %v1692
        %v1694 = vpop.f32.mrb[0].mxu0
        %v1695 = vadd.f32 0.0, %v1694
        %v1696 = vpop.f32.mrb[0].mxu0
        %v1697 = vadd.f32 0.0, %v1696
        %v1698 = vpop.f32.mrb[0].mxu0
        %v1699 = vadd.f32 0.0, %v1698
        %1700 = vmatprep.mubr.bf16.mxu0 %v779
        %1701 = vmatmul.mubr.bf16.gmra.mrb[0].mxu0 %v778
        %v1702 = vpop.f32.mrb[0].mxu0
        %v1703 = vadd.f32 0.0, %v1702
        %v1704 = vpop.f32.mrb[0].mxu0
        %v1705 = vadd.f32 0.0, %v1704
        %v1706 = vpop.f32.mrb[0].mxu0
        %v1707 = vadd.f32 0.0, %v1706
        %v1708 = vpop.f32.mrb[0].mxu0
        %v1709 = vadd.f32 0.0, %v1708
        %1710 = vmatprep.mubr.bf16.mxu0 %v784
        %1711 = vmatmul.mubr.bf16.gmra.mrb[0].mxu0 %v783
        %v1712 = vpop.f32.mrb[0].mxu0
        %v1713 = vadd.f32 0.0, %v1712
        %v1714 = vpop.f32.mrb[0].mxu0
        %v1715 = vadd.f32 0.0, %v1714
        %v1716 = vpop.f32.mrb[0].mxu0
        %v1717 = vadd.f32 0.0, %v1716
        %v1718 = vpop.f32.mrb[0].mxu0
        %v1719 = vadd.f32 0.0, %v1718
        %1720 = vmatprep.mubr.bf16.mxu0 %v789
        %1721 = vmatmul.mubr.bf16.gmra.mrb[0].mxu0 %v788
        %v1722 = vpop.f32.mrb[0].mxu0
        %v1723 = vadd.f32 0.0, %v1722
        %v1724 = vpop.f32.mrb[0].mxu0
        %v1725 = vadd.f32 0.0, %v1724
        %v1726 = vpop.f32.mrb[0].mxu0
        %v1727 = vadd.f32 0.0, %v1726
        %v1728 = vpop.f32.mrb[0].mxu0
        %v1729 = vadd.f32 0.0, %v1728
        %1730 = vmatprep.mubr.bf16.mxu0 %v794
        %1731 = vmatmul.mubr.bf16.gmra.mrb[0].mxu0 %v793
        %v1732 = vpop.f32.mrb[0].mxu0
        %v1733 = vadd.f32 0.0, %v1732
        %v1734 = vpop.f32.mrb[0].mxu0
        %v1735 = vadd.f32 0.0, %v1734
        %v1736 = vpop.f32.mrb[0].mxu0
        %v1737 = vadd.f32 0.0, %v1736
        %v1738 = vpop.f32.mrb[0].mxu0
        %v1739 = vadd.f32 0.0, %v1738
        %1740 = vmatprep.mubr.bf16.mxu0 %v799
        %1741 = vmatmul.mubr.bf16.gmra.mrb[0].mxu0 %v798
        %v1742 = vpop.f32.mrb[0].mxu0
        %v1743 = vadd.f32 0.0, %v1742
        %v1744 = vpop.f32.mrb[0].mxu0
        %v1745 = vadd.f32 0.0, %v1744
        %v1746 = vpop.f32.mrb[0].mxu0
        %v1747 = vadd.f32 0.0, %v1746
        %v1748 = vpop.f32.mrb[0].mxu0
        %v1749 = vadd.f32 0.0, %v1748
        %1750 = vmatprep.mubr.bf16.mxu0 %v804
        %1751 = vmatmul.mubr.bf16.gmra.mrb[0].mxu0 %v803
        %v1752 = vpop.f32.mrb[0].mxu0
        %v1753 = vadd.f32 0.0, %v1752
        %v1754 = vpop.f32.mrb[0].mxu0
        %v1755 = vadd.f32 0.0, %v1754
        %v1756 = vpop.f32.mrb[0].mxu0
        %v1757 = vadd.f32 0.0, %v1756
        %v1758 = vpop.f32.mrb[0].mxu0
        %v1759 = vadd.f32 0.0, %v1758
        %1760 = vdwg.mxu0
        %1761 = vmatprep.subr.bf16.mxu0 %v1393
        %1762 = vmatpush1.bf16.msra.mxu0 %v1392
        %1763 = vmatprep.subr.bf16.mxu0 %v1397
        %1764 = vmatpush1.bf16.msra.mxu0 %v1396
        %1765 = vmatprep.subr.bf16.mxu0 %v1401
        %1766 = vmatpush1.bf16.msra.mxu0 %v1400
        %1767 = vmatprep.subr.bf16.mxu0 %v1405
        %1768 = vmatpush1.bf16.msra.mxu0 %v1404
        %1769 = vmatprep.subr.bf16.mxu0 %v1409
        %1770 = vmatpush1.bf16.msra.mxu0 %v1408
        %1771 = vmatprep.subr.bf16.mxu0 %v1413
        %1772 = vmatpush1.bf16.msra.mxu0 %v1412
        %1773 = vmatprep.subr.bf16.mxu0 %v1417
        %1774 = vmatpush1.bf16.msra.mxu0 %v1416
        %1775 = vmatprep.subr.bf16.mxu0 %v1421
        %1776 = vmatpush1.bf16.msra.mxu0 %v1420
        %1777 = vmatprep.subr.bf16.mxu0 %v1425
        %1778 = vmatpush1.bf16.msra.mxu0 %v1424
        %1779 = vmatprep.subr.bf16.mxu0 %v1429
        %1780 = vmatpush1.bf16.msra.mxu0 %v1428
        %1781 = vmatprep.subr.bf16.mxu0 %v1433
        %1782 = vmatpush1.bf16.msra.mxu0 %v1432
        %1783 = vmatprep.subr.bf16.mxu0 %v1437
        %1784 = vmatpush1.bf16.msra.mxu0 %v1436
        %1785 = vmatprep.subr.bf16.mxu0 %v1441
        %1786 = vmatpush1.bf16.msra.mxu0 %v1440
        %1787 = vmatprep.subr.bf16.mxu0 %v1445
        %1788 = vmatpush1.bf16.msra.mxu0 %v1444
        %1789 = vmatprep.subr.bf16.mxu0 %v1449
        %1790 = vmatpush1.bf16.msra.mxu0 %v1448
        %1791 = vmatprep.subr.bf16.mxu0 %v1453
        %1792 = vmatpush1.bf16.msra.mxu0 %v1452
        %1793 = vmatprep.mubr.bf16.mxu0 %v771
        %1794 = vmatmul.mubr.bf16.gmra.mrb[0].mxu0 %v770
        %v1795 = vpop.f32.mrb[0].mxu0
        %v1796 = vadd.f32 %v1683, %v1795
        %v1797 = vpop.f32.mrb[0].mxu0
        %v1798 = vadd.f32 %v1685, %v1797
        %v1799 = vpop.f32.mrb[0].mxu0
        %v1800 = vadd.f32 %v1687, %v1799
        %v1801 = vpop.f32.mrb[0].mxu0
        %v1802 = vadd.f32 %v1689, %v1801
        %1803 = vmatprep.mubr.bf16.mxu0 %v776
        %1804 = vmatmul.mubr.bf16.gmra.mrb[0].mxu0 %v775
        %v1805 = vpop.f32.mrb[0].mxu0
        %v1806 = vadd.f32 %v1693, %v1805
        %v1807 = vpop.f32.mrb[0].mxu0
        %v1808 = vadd.f32 %v1695, %v1807
        %v1809 = vpop.f32.mrb[0].mxu0
        %v1810 = vadd.f32 %v1697, %v1809
        %v1811 = vpop.f32.mrb[0].mxu0
        %v1812 = vadd.f32 %v1699, %v1811
        %1813 = vmatprep.mubr.bf16.mxu0 %v781
        %1814 = vmatmul.mubr.bf16.gmra.mrb[0].mxu0 %v780
        %v1815 = vpop.f32.mrb[0].mxu0
        %v1816 = vadd.f32 %v1703, %v1815
        %v1817 = vpop.f32.mrb[0].mxu0
        %v1818 = vadd.f32 %v1705, %v1817
        %v1819 = vpop.f32.mrb[0].mxu0
        %v1820 = vadd.f32 %v1707, %v1819
        %v1821 = vpop.f32.mrb[0].mxu0
        %v1822 = vadd.f32 %v1709, %v1821
        %1823 = vmatprep.mubr.bf16.mxu0 %v786
        %1824 = vmatmul.mubr.bf16.gmra.mrb[0].mxu0 %v785
        %v1825 = vpop.f32.mrb[0].mxu0
        %v1826 = vadd.f32 %v1713, %v1825
        %v1827 = vpop.f32.mrb[0].mxu0
        %v1828 = vadd.f32 %v1715, %v1827
        %v1829 = vpop.f32.mrb[0].mxu0
        %v1830 = vadd.f32 %v1717, %v1829
        %v1831 = vpop.f32.mrb[0].mxu0
        %v1832 = vadd.f32 %v1719, %v1831
        %1833 = vmatprep.mubr.bf16.mxu0 %v791
        %1834 = vmatmul.mubr.bf16.gmra.mrb[0].mxu0 %v790
        %v1835 = vpop.f32.mrb[0].mxu0
        %v1836 = vadd.f32 %v1723, %v1835
        %v1837 = vpop.f32.mrb[0].mxu0
        %v1838 = vadd.f32 %v1725, %v1837
        %v1839 = vpop.f32.mrb[0].mxu0
        %v1840 = vadd.f32 %v1727, %v1839
        %v1841 = vpop.f32.mrb[0].mxu0
        %v1842 = vadd.f32 %v1729, %v1841
        %1843 = vmatprep.mubr.bf16.mxu0 %v796
        %1844 = vmatmul.mubr.bf16.gmra.mrb[0].mxu0 %v795
        %v1845 = vpop.f32.mrb[0].mxu0
        %v1846 = vadd.f32 %v1733, %v1845
        %v1847 = vpop.f32.mrb[0].mxu0
        %v1848 = vadd.f32 %v1735, %v1847
        %v1849 = vpop.f32.mrb[0].mxu0
        %v1850 = vadd.f32 %v1737, %v1849
        %v1851 = vpop.f32.mrb[0].mxu0
        %v1852 = vadd.f32 %v1739, %v1851
        %1853 = vmatprep.mubr.bf16.mxu0 %v801
        %1854 = vmatmul.mubr.bf16.gmra.mrb[0].mxu0 %v800
        %v1855 = vpop.f32.mrb[0].mxu0
        %v1856 = vadd.f32 %v1743, %v1855
        %v1857 = vpop.f32.mrb[0].mxu0
        %v1858 = vadd.f32 %v1745, %v1857
        %v1859 = vpop.f32.mrb[0].mxu0
        %v1860 = vadd.f32 %v1747, %v1859
        %v1861 = vpop.f32.mrb[0].mxu0
        %v1862 = vadd.f32 %v1749, %v1861
        %1863 = vmatprep.mubr.bf16.mxu0 %v806
        %1864 = vmatmul.mubr.bf16.gmra.mrb[0].mxu0 %v805
        %v1865 = vpop.f32.mrb[0].mxu0
        %v1866 = vadd.f32 %v1753, %v1865
        %v1867 = vpop.f32.mrb[0].mxu0
        %v1868 = vadd.f32 %v1755, %v1867
        %v1869 = vpop.f32.mrb[0].mxu0
        %v1870 = vadd.f32 %v1757, %v1869
        %v1871 = vpop.f32.mrb[0].mxu0
        %v1872 = vadd.f32 %v1759, %v1871
        %1873 = vdwg.mxu0
        %1874 = vmatprep.subr.bf16.mxu0 %v1457
        %1875 = vmatpush1.bf16.msra.mxu0 %v1456
        %1876 = vmatprep.subr.bf16.mxu0 %v1461
        %1877 = vmatpush1.bf16.msra.mxu0 %v1460
        %1878 = vmatprep.subr.bf16.mxu0 %v1465
        %1879 = vmatpush1.bf16.msra.mxu0 %v1464
        %1880 = vmatprep.subr.bf16.mxu0 %v1469
        %1881 = vmatpush1.bf16.msra.mxu0 %v1468
        %1882 = vmatprep.subr.bf16.mxu0 %v1473
        %1883 = vmatpush1.bf16.msra.mxu0 %v1472
        %1884 = vmatprep.subr.bf16.mxu0 %v1477
        %1885 = vmatpush1.bf16.msra.mxu0 %v1476
        %1886 = vmatprep.subr.bf16.mxu0 %v1481
        %1887 = vmatpush1.bf16.msra.mxu0 %v1480
        %1888 = vmatprep.subr.bf16.mxu0 %v1485
        %1889 = vmatpush1.bf16.msra.mxu0 %v1484
        %1890 = vmatprep.subr.bf16.mxu0 0
        %1891 = vmatpush1.bf16.msra.mxu0 0
        %1892 = vmatprep.subr.bf16.mxu0 0
        %1893 = vmatpush1.bf16.msra.mxu0 0
        %1894 = vmatprep.subr.bf16.mxu0 0
        %1895 = vmatpush1.bf16.msra.mxu0 0
        %1896 = vmatprep.subr.bf16.mxu0 0
        %1897 = vmatpush1.bf16.msra.mxu0 0
        %1898 = vmatprep.subr.bf16.mxu0 0
        %1899 = vmatpush1.bf16.msra.mxu0 0
        %1900 = vmatprep.subr.bf16.mxu0 0
        %1901 = vmatpush1.bf16.msra.mxu0 0
        %1902 = vmatprep.subr.bf16.mxu0 0
        %1903 = vmatpush1.bf16.msra.mxu0 0
        %1904 = vmatprep.subr.bf16.mxu0 0
        %1905 = vmatpush1.bf16.msra.mxu0 0
        %1906 = vmatprep.mubr.bf16.mxu0 0
        %1907 = vmatmul.mubr.bf16.gmra.mrb[0].mxu0 %v772
        %v1908 = vpop.f32.mrb[0].mxu0
        %v1909 = vadd.f32 %v1796, %v1908
        %v1910 = vpop.f32.mrb[0].mxu0
        %v1911 = vadd.f32 %v1798, %v1910
        %v1912 = vpop.f32.mrb[0].mxu0
        %v1913 = vadd.f32 %v1800, %v1912
        %v1914 = vpop.f32.mrb[0].mxu0
        %v1915 = vadd.f32 %v1802, %v1914
        %1916 = vmatprep.mubr.bf16.mxu0 0
        %1917 = vmatmul.mubr.bf16.gmra.mrb[0].mxu0 %v777
        %v1918 = vpop.f32.mrb[0].mxu0
        %v1919 = vadd.f32 %v1806, %v1918
        %v1920 = vpop.f32.mrb[0].mxu0
        %v1921 = vadd.f32 %v1808, %v1920
        %v1922 = vpop.f32.mrb[0].mxu0
        %v1923 = vadd.f32 %v1810, %v1922
        %v1924 = vpop.f32.mrb[0].mxu0
        %v1925 = vadd.f32 %v1812, %v1924
        %1926 = vmatprep.mubr.bf16.mxu0 0
        %1927 = vmatmul.mubr.bf16.gmra.mrb[0].mxu0 %v782
        %v1928 = vpop.f32.mrb[0].mxu0
        %v1929 = vadd.f32 %v1816, %v1928
        %v1930 = vpop.f32.mrb[0].mxu0
        %v1931 = vadd.f32 %v1818, %v1930
        %v1932 = vpop.f32.mrb[0].mxu0
        %v1933 = vadd.f32 %v1820, %v1932
        %v1934 = vpop.f32.mrb[0].mxu0
        %v1935 = vadd.f32 %v1822, %v1934
        %1936 = vmatprep.mubr.bf16.mxu0 0
        %1937 = vmatmul.mubr.bf16.gmra.mrb[0].mxu0 %v787
        %v1938 = vpop.f32.mrb[0].mxu0
        %v1939 = vadd.f32 %v1826, %v1938
        %v1940 = vpop.f32.mrb[0].mxu0
        %v1941 = vadd.f32 %v1828, %v1940
        %v1942 = vpop.f32.mrb[0].mxu0
        %v1943 = vadd.f32 %v1830, %v1942
        %v1944 = vpop.f32.mrb[0].mxu0
        %v1945 = vadd.f32 %v1832, %v1944
        %1946 = vmatprep.mubr.bf16.mxu0 0
        %1947 = vmatmul.mubr.bf16.gmra.mrb[0].mxu0 %v792
        %v1948 = vpop.f32.mrb[0].mxu0
        %v1949 = vadd.f32 %v1836, %v1948
        %v1950 = vpop.f32.mrb[0].mxu0
        %v1951 = vadd.f32 %v1838, %v1950
        %v1952 = vpop.f32.mrb[0].mxu0
        %v1953 = vadd.f32 %v1840, %v1952
        %v1954 = vpop.f32.mrb[0].mxu0
        %v1955 = vadd.f32 %v1842, %v1954
        %1956 = vmatprep.mubr.bf16.mxu0 0
        %1957 = vmatmul.mubr.bf16.gmra.mrb[0].mxu0 %v797
        %v1958 = vpop.f32.mrb[0].mxu0
        %v1959 = vadd.f32 %v1846, %v1958
        %v1960 = vpop.f32.mrb[0].mxu0
        %v1961 = vadd.f32 %v1848, %v1960
        %v1962 = vpop.f32.mrb[0].mxu0
        %v1963 = vadd.f32 %v1850, %v1962
        %v1964 = vpop.f32.mrb[0].mxu0
        %v1965 = vadd.f32 %v1852, %v1964
        %1966 = vmatprep.mubr.bf16.mxu0 0
        %1967 = vmatmul.mubr.bf16.gmra.mrb[0].mxu0 %v802
        %v1968 = vpop.f32.mrb[0].mxu0
        %v1969 = vadd.f32 %v1856, %v1968
        %v1970 = vpop.f32.mrb[0].mxu0
        %v1971 = vadd.f32 %v1858, %v1970
        %v1972 = vpop.f32.mrb[0].mxu0
        %v1973 = vadd.f32 %v1860, %v1972
        %v1974 = vpop.f32.mrb[0].mxu0
        %v1975 = vadd.f32 %v1862, %v1974
        %1976 = vmatprep.mubr.bf16.mxu0 0
        %1977 = vmatmul.mubr.bf16.gmra.mrb[0].mxu0 %v807
        %v1978 = vpop.f32.mrb[0].mxu0
        %v1979 = vadd.f32 %v1866, %v1978
        %v1980 = vpop.f32.mrb[0].mxu0
        %v1981 = vadd.f32 %v1868, %v1980
        %v1982 = vpop.f32.mrb[0].mxu0
        %v1983 = vadd.f32 %v1870, %v1982
        %v1984 = vpop.f32.mrb[0].mxu0
        %v1985 = vadd.f32 %v1872, %v1984
        %1986 = vdwg.mxu0
        %1987 = vmatprep.subr.bf16.mxu0 %v1331
        %1988 = vmatpush1.bf16.msra.mxu0 %v1330
        %1989 = vmatprep.subr.bf16.mxu0 %v1335
        %1990 = vmatpush1.bf16.msra.mxu0 %v1334
        %1991 = vmatprep.subr.bf16.mxu0 %v1339
        %1992 = vmatpush1.bf16.msra.mxu0 %v1338
        %1993 = vmatprep.subr.bf16.mxu0 %v1343
        %1994 = vmatpush1.bf16.msra.mxu0 %v1342
        %1995 = vmatprep.subr.bf16.mxu0 %v1347
        %1996 = vmatpush1.bf16.msra.mxu0 %v1346
        %1997 = vmatprep.subr.bf16.mxu0 %v1351
        %1998 = vmatpush1.bf16.msra.mxu0 %v1350
        %1999 = vmatprep.subr.bf16.mxu0 %v1355
        %2000 = vmatpush1.bf16.msra.mxu0 %v1354
        %2001 = vmatprep.subr.bf16.mxu0 %v1359
        %2002 = vmatpush1.bf16.msra.mxu0 %v1358
        %2003 = vmatprep.subr.bf16.mxu0 %v1363
        %2004 = vmatpush1.bf16.msra.mxu0 %v1362
        %2005 = vmatprep.subr.bf16.mxu0 %v1367
        %2006 = vmatpush1.bf16.msra.mxu0 %v1366
        %2007 = vmatprep.subr.bf16.mxu0 %v1371
        %2008 = vmatpush1.bf16.msra.mxu0 %v1370
        %2009 = vmatprep.subr.bf16.mxu0 %v1375
        %2010 = vmatpush1.bf16.msra.mxu0 %v1374
        %2011 = vmatprep.subr.bf16.mxu0 %v1379
        %2012 = vmatpush1.bf16.msra.mxu0 %v1378
        %2013 = vmatprep.subr.bf16.mxu0 %v1383
        %2014 = vmatpush1.bf16.msra.mxu0 %v1382
        %2015 = vmatprep.subr.bf16.mxu0 %v1387
        %2016 = vmatpush1.bf16.msra.mxu0 %v1386
        %2017 = vmatprep.subr.bf16.mxu0 %v1391
        %2018 = vmatpush1.bf16.msra.mxu0 %v1390
        %2019 = vmatprep.mubr.bf16.mxu0 %v769
        %2020 = vmatmul.mubr.bf16.gmra.mrb[0].mxu0 %v768
        %v2021 = vpop.f32.mrb[0].mxu0
        %v2022 = vadd.f32 0.0, %v2021
        %v2023 = vpop.f32.mrb[0].mxu0
        %v2024 = vadd.f32 0.0, %v2023
        %v2025 = vpop.f32.mrb[0].mxu0
        %v2026 = vadd.f32 0.0, %v2025
        %v2027 = vpop.f32.mrb[0].mxu0
        %v2028 = vadd.f32 0.0, %v2027
        %2029 = vmatprep.mubr.bf16.mxu0 %v774
        %2030 = vmatmul.mubr.bf16.gmra.mrb[0].mxu0 %v773
        %v2031 = vpop.f32.mrb[0].mxu0
        %v2032 = vadd.f32 0.0, %v2031
        %v2033 = vpop.f32.mrb[0].mxu0
        %v2034 = vadd.f32 0.0, %v2033
        %v2035 = vpop.f32.mrb[0].mxu0
        %v2036 = vadd.f32 0.0, %v2035
        %v2037 = vpop.f32.mrb[0].mxu0
        %v2038 = vadd.f32 0.0, %v2037
        %2039 = vmatprep.mubr.bf16.mxu0 %v779
        %2040 = vmatmul.mubr.bf16.gmra.mrb[0].mxu0 %v778
        %v2041 = vpop.f32.mrb[0].mxu0
        %v2042 = vadd.f32 0.0, %v2041
        %v2043 = vpop.f32.mrb[0].mxu0
        %v2044 = vadd.f32 0.0, %v2043
        %v2045 = vpop.f32.mrb[0].mxu0
        %v2046 = vadd.f32 0.0, %v2045
        %v2047 = vpop.f32.mrb[0].mxu0
        %v2048 = vadd.f32 0.0, %v2047
        %2049 = vmatprep.mubr.bf16.mxu0 %v784
        %2050 = vmatmul.mubr.bf16.gmra.mrb[0].mxu0 %v783
        %v2051 = vpop.f32.mrb[0].mxu0
        %v2052 = vadd.f32 0.0, %v2051
        %v2053 = vpop.f32.mrb[0].mxu0
        %v2054 = vadd.f32 0.0, %v2053
        %v2055 = vpop.f32.mrb[0].mxu0
        %v2056 = vadd.f32 0.0, %v2055
        %v2057 = vpop.f32.mrb[0].mxu0
        %v2058 = vadd.f32 0.0, %v2057
        %2059 = vmatprep.mubr.bf16.mxu0 %v789
        %2060 = vmatmul.mubr.bf16.gmra.mrb[0].mxu0 %v788
        %v2061 = vpop.f32.mrb[0].mxu0
        %v2062 = vadd.f32 0.0, %v2061
        %v2063 = vpop.f32.mrb[0].mxu0
        %v2064 = vadd.f32 0.0, %v2063
        %v2065 = vpop.f32.mrb[0].mxu0
        %v2066 = vadd.f32 0.0, %v2065
        %v2067 = vpop.f32.mrb[0].mxu0
        %v2068 = vadd.f32 0.0, %v2067
        %2069 = vmatprep.mubr.bf16.mxu0 %v794
        %2070 = vmatmul.mubr.bf16.gmra.mrb[0].mxu0 %v793
        %v2071 = vpop.f32.mrb[0].mxu0
        %v2072 = vadd.f32 0.0, %v2071
        %v2073 = vpop.f32.mrb[0].mxu0
        %v2074 = vadd.f32 0.0, %v2073
        %v2075 = vpop.f32.mrb[0].mxu0
        %v2076 = vadd.f32 0.0, %v2075
        %v2077 = vpop.f32.mrb[0].mxu0
        %v2078 = vadd.f32 0.0, %v2077
        %2079 = vmatprep.mubr.bf16.mxu0 %v799
        %2080 = vmatmul.mubr.bf16.gmra.mrb[0].mxu0 %v798
        %v2081 = vpop.f32.mrb[0].mxu0
        %v2082 = vadd.f32 0.0, %v2081
        %v2083 = vpop.f32.mrb[0].mxu0
        %v2084 = vadd.f32 0.0, %v2083
        %v2085 = vpop.f32.mrb[0].mxu0
        %v2086 = vadd.f32 0.0, %v2085
        %v2087 = vpop.f32.mrb[0].mxu0
        %v2088 = vadd.f32 0.0, %v2087
        %2089 = vmatprep.mubr.bf16.mxu0 %v804
        %2090 = vmatmul.mubr.bf16.gmra.mrb[0].mxu0 %v803
        %v2091 = vpop.f32.mrb[0].mxu0
        %v2092 = vadd.f32 0.0, %v2091
        %v2093 = vpop.f32.mrb[0].mxu0
        %v2094 = vadd.f32 0.0, %v2093
        %v2095 = vpop.f32.mrb[0].mxu0
        %v2096 = vadd.f32 0.0, %v2095
        %v2097 = vpop.f32.mrb[0].mxu0
        %v2098 = vadd.f32 0.0, %v2097
        %2099 = vdwg.mxu0
        %2100 = vmatprep.subr.bf16.mxu0 %v1395
        %2101 = vmatpush1.bf16.msra.mxu0 %v1394
        %2102 = vmatprep.subr.bf16.mxu0 %v1399
        %2103 = vmatpush1.bf16.msra.mxu0 %v1398
        %2104 = vmatprep.subr.bf16.mxu0 %v1403
        %2105 = vmatpush1.bf16.msra.mxu0 %v1402
        %2106 = vmatprep.subr.bf16.mxu0 %v1407
        %2107 = vmatpush1.bf16.msra.mxu0 %v1406
        %2108 = vmatprep.subr.bf16.mxu0 %v1411
        %2109 = vmatpush1.bf16.msra.mxu0 %v1410
        %2110 = vmatprep.subr.bf16.mxu0 %v1415
        %2111 = vmatpush1.bf16.msra.mxu0 %v1414
        %2112 = vmatprep.subr.bf16.mxu0 %v1419
        %2113 = vmatpush1.bf16.msra.mxu0 %v1418
        %2114 = vmatprep.subr.bf16.mxu0 %v1423
        %2115 = vmatpush1.bf16.msra.mxu0 %v1422
        %2116 = vmatprep.subr.bf16.mxu0 %v1427
        %2117 = vmatpush1.bf16.msra.mxu0 %v1426
        %2118 = vmatprep.subr.bf16.mxu0 %v1431
        %2119 = vmatpush1.bf16.msra.mxu0 %v1430
        %2120 = vmatprep.subr.bf16.mxu0 %v1435
        %2121 = vmatpush1.bf16.msra.mxu0 %v1434
        %2122 = vmatprep.subr.bf16.mxu0 %v1439
        %2123 = vmatpush1.bf16.msra.mxu0 %v1438
        %2124 = vmatprep.subr.bf16.mxu0 %v1443
        %2125 = vmatpush1.bf16.msra.mxu0 %v1442
        %2126 = vmatprep.subr.bf16.mxu0 %v1447
        %2127 = vmatpush1.bf16.msra.mxu0 %v1446
        %2128 = vmatprep.subr.bf16.mxu0 %v1451
        %2129 = vmatpush1.bf16.msra.mxu0 %v1450
        %2130 = vmatprep.subr.bf16.mxu0 %v1455
        %2131 = vmatpush1.bf16.msra.mxu0 %v1454
        %2132 = vmatprep.mubr.bf16.mxu0 %v771
        %2133 = vmatmul.mubr.bf16.gmra.mrb[0].mxu0 %v770
        %v2134 = vpop.f32.mrb[0].mxu0
        %v2135 = vadd.f32 %v2022, %v2134
        %v2136 = vpop.f32.mrb[0].mxu0
        %v2137 = vadd.f32 %v2024, %v2136
        %v2138 = vpop.f32.mrb[0].mxu0
        %v2139 = vadd.f32 %v2026, %v2138
        %v2140 = vpop.f32.mrb[0].mxu0
        %v2141 = vadd.f32 %v2028, %v2140
        %2142 = vmatprep.mubr.bf16.mxu0 %v776
        %2143 = vmatmul.mubr.bf16.gmra.mrb[0].mxu0 %v775
        %v2144 = vpop.f32.mrb[0].mxu0
        %v2145 = vadd.f32 %v2032, %v2144
        %v2146 = vpop.f32.mrb[0].mxu0
        %v2147 = vadd.f32 %v2034, %v2146
        %v2148 = vpop.f32.mrb[0].mxu0
        %v2149 = vadd.f32 %v2036, %v2148
        %v2150 = vpop.f32.mrb[0].mxu0
        %v2151 = vadd.f32 %v2038, %v2150
        %2152 = vmatprep.mubr.bf16.mxu0 %v781
        %2153 = vmatmul.mubr.bf16.gmra.mrb[0].mxu0 %v780
        %v2154 = vpop.f32.mrb[0].mxu0
        %v2155 = vadd.f32 %v2042, %v2154
        %v2156 = vpop.f32.mrb[0].mxu0
        %v2157 = vadd.f32 %v2044, %v2156
        %v2158 = vpop.f32.mrb[0].mxu0
        %v2159 = vadd.f32 %v2046, %v2158
        %v2160 = vpop.f32.mrb[0].mxu0
        %v2161 = vadd.f32 %v2048, %v2160
        %2162 = vmatprep.mubr.bf16.mxu0 %v786
        %2163 = vmatmul.mubr.bf16.gmra.mrb[0].mxu0 %v785
        %v2164 = vpop.f32.mrb[0].mxu0
        %v2165 = vadd.f32 %v2052, %v2164
        %v2166 = vpop.f32.mrb[0].mxu0
        %v2167 = vadd.f32 %v2054, %v2166
        %v2168 = vpop.f32.mrb[0].mxu0
        %v2169 = vadd.f32 %v2056, %v2168
        %v2170 = vpop.f32.mrb[0].mxu0
        %v2171 = vadd.f32 %v2058, %v2170
        %2172 = vmatprep.mubr.bf16.mxu0 %v791
        %2173 = vmatmul.mubr.bf16.gmra.mrb[0].mxu0 %v790
        %v2174 = vpop.f32.mrb[0].mxu0
        %v2175 = vadd.f32 %v2062, %v2174
        %v2176 = vpop.f32.mrb[0].mxu0
        %v2177 = vadd.f32 %v2064, %v2176
        %v2178 = vpop.f32.mrb[0].mxu0
        %v2179 = vadd.f32 %v2066, %v2178
        %v2180 = vpop.f32.mrb[0].mxu0
        %v2181 = vadd.f32 %v2068, %v2180
        %2182 = vmatprep.mubr.bf16.mxu0 %v796
        %2183 = vmatmul.mubr.bf16.gmra.mrb[0].mxu0 %v795
        %v2184 = vpop.f32.mrb[0].mxu0
        %v2185 = vadd.f32 %v2072, %v2184
        %v2186 = vpop.f32.mrb[0].mxu0
        %v2187 = vadd.f32 %v2074, %v2186
        %v2188 = vpop.f32.mrb[0].mxu0
        %v2189 = vadd.f32 %v2076, %v2188
        %v2190 = vpop.f32.mrb[0].mxu0
        %v2191 = vadd.f32 %v2078, %v2190
        %2192 = vmatprep.mubr.bf16.mxu0 %v801
        %2193 = vmatmul.mubr.bf16.gmra.mrb[0].mxu0 %v800
        %v2194 = vpop.f32.mrb[0].mxu0
        %v2195 = vadd.f32 %v2082, %v2194
        %v2196 = vpop.f32.mrb[0].mxu0
        %v2197 = vadd.f32 %v2084, %v2196
        %v2198 = vpop.f32.mrb[0].mxu0
        %v2199 = vadd.f32 %v2086, %v2198
        %v2200 = vpop.f32.mrb[0].mxu0
        %v2201 = vadd.f32 %v2088, %v2200
        %2202 = vmatprep.mubr.bf16.mxu0 %v806
        %2203 = vmatmul.mubr.bf16.gmra.mrb[0].mxu0 %v805
        %v2204 = vpop.f32.mrb[0].mxu0
        %v2205 = vadd.f32 %v2092, %v2204
        %v2206 = vpop.f32.mrb[0].mxu0
        %v2207 = vadd.f32 %v2094, %v2206
        %v2208 = vpop.f32.mrb[0].mxu0
        %v2209 = vadd.f32 %v2096, %v2208
        %v2210 = vpop.f32.mrb[0].mxu0
        %v2211 = vadd.f32 %v2098, %v2210
        %2212 = vdwg.mxu0
        %2213 = vmatprep.subr.bf16.mxu0 %v1459
        %2214 = vmatpush1.bf16.msra.mxu0 %v1458
        %2215 = vmatprep.subr.bf16.mxu0 %v1463
        %2216 = vmatpush1.bf16.msra.mxu0 %v1462
        %2217 = vmatprep.subr.bf16.mxu0 %v1467
        %2218 = vmatpush1.bf16.msra.mxu0 %v1466
        %2219 = vmatprep.subr.bf16.mxu0 %v1471
        %2220 = vmatpush1.bf16.msra.mxu0 %v1470
        %2221 = vmatprep.subr.bf16.mxu0 %v1475
        %2222 = vmatpush1.bf16.msra.mxu0 %v1474
        %2223 = vmatprep.subr.bf16.mxu0 %v1479
        %2224 = vmatpush1.bf16.msra.mxu0 %v1478
        %2225 = vmatprep.subr.bf16.mxu0 %v1483
        %2226 = vmatpush1.bf16.msra.mxu0 %v1482
        %2227 = vmatprep.subr.bf16.mxu0 %v1487
        %2228 = vmatpush1.bf16.msra.mxu0 %v1486
        %2229 = vmatprep.subr.bf16.mxu0 0
        %2230 = vmatpush1.bf16.msra.mxu0 0
        %2231 = vmatprep.subr.bf16.mxu0 0
        %2232 = vmatpush1.bf16.msra.mxu0 0
        %2233 = vmatprep.subr.bf16.mxu0 0
        %2234 = vmatpush1.bf16.msra.mxu0 0
        %2235 = vmatprep.subr.bf16.mxu0 0
        %2236 = vmatpush1.bf16.msra.mxu0 0
        %2237 = vmatprep.subr.bf16.mxu0 0
        %2238 = vmatpush1.bf16.msra.mxu0 0
        %2239 = vmatprep.subr.bf16.mxu0 0
        %2240 = vmatpush1.bf16.msra.mxu0 0
        %2241 = vmatprep.subr.bf16.mxu0 0
        %2242 = vmatpush1.bf16.msra.mxu0 0
        %2243 = vmatprep.subr.bf16.mxu0 0
        %2244 = vmatpush1.bf16.msra.mxu0 0
        %2245 = vmatprep.mubr.bf16.mxu0 0
        %2246 = vmatmul.mubr.bf16.gmra.mrb[0].mxu0 %v772
        %v2247 = vpop.f32.mrb[0].mxu0
        %v2248 = vadd.f32 %v2135, %v2247
        %v2249 = vpop.f32.mrb[0].mxu0
        %v2250 = vadd.f32 %v2137, %v2249
        %v2251 = vpop.f32.mrb[0].mxu0
        %v2252 = vadd.f32 %v2139, %v2251
        %v2253 = vpop.f32.mrb[0].mxu0
        %v2254 = vadd.f32 %v2141, %v2253
        %2255 = vmatprep.mubr.bf16.mxu0 0
        %2256 = vmatmul.mubr.bf16.gmra.mrb[0].mxu0 %v777
        %v2257 = vpop.f32.mrb[0].mxu0
        %v2258 = vadd.f32 %v2145, %v2257
        %v2259 = vpop.f32.mrb[0].mxu0
        %v2260 = vadd.f32 %v2147, %v2259
        %v2261 = vpop.f32.mrb[0].mxu0
        %v2262 = vadd.f32 %v2149, %v2261
        %v2263 = vpop.f32.mrb[0].mxu0
        %v2264 = vadd.f32 %v2151, %v2263
        %2265 = vmatprep.mubr.bf16.mxu0 0
        %2266 = vmatmul.mubr.bf16.gmra.mrb[0].mxu0 %v782
        %v2267 = vpop.f32.mrb[0].mxu0
        %v2268 = vadd.f32 %v2155, %v2267
        %v2269 = vpop.f32.mrb[0].mxu0
        %v2270 = vadd.f32 %v2157, %v2269
        %v2271 = vpop.f32.mrb[0].mxu0
        %v2272 = vadd.f32 %v2159, %v2271
        %v2273 = vpop.f32.mrb[0].mxu0
        %v2274 = vadd.f32 %v2161, %v2273
        %2275 = vmatprep.mubr.bf16.mxu0 0
        %2276 = vmatmul.mubr.bf16.gmra.mrb[0].mxu0 %v787
        %v2277 = vpop.f32.mrb[0].mxu0
        %v2278 = vadd.f32 %v2165, %v2277
        %v2279 = vpop.f32.mrb[0].mxu0
        %v2280 = vadd.f32 %v2167, %v2279
        %v2281 = vpop.f32.mrb[0].mxu0
        %v2282 = vadd.f32 %v2169, %v2281
        %v2283 = vpop.f32.mrb[0].mxu0
        %v2284 = vadd.f32 %v2171, %v2283
        %2285 = vmatprep.mubr.bf16.mxu0 0
        %2286 = vmatmul.mubr.bf16.gmra.mrb[0].mxu0 %v792
        %v2287 = vpop.f32.mrb[0].mxu0
        %v2288 = vadd.f32 %v2175, %v2287
        %v2289 = vpop.f32.mrb[0].mxu0
        %v2290 = vadd.f32 %v2177, %v2289
        %v2291 = vpop.f32.mrb[0].mxu0
        %v2292 = vadd.f32 %v2179, %v2291
        %v2293 = vpop.f32.mrb[0].mxu0
        %v2294 = vadd.f32 %v2181, %v2293
        %2295 = vmatprep.mubr.bf16.mxu0 0
        %2296 = vmatmul.mubr.bf16.gmra.mrb[0].mxu0 %v797
        %v2297 = vpop.f32.mrb[0].mxu0
        %v2298 = vadd.f32 %v2185, %v2297
        %v2299 = vpop.f32.mrb[0].mxu0
        %v2300 = vadd.f32 %v2187, %v2299
        %v2301 = vpop.f32.mrb[0].mxu0
        %v2302 = vadd.f32 %v2189, %v2301
        %v2303 = vpop.f32.mrb[0].mxu0
        %v2304 = vadd.f32 %v2191, %v2303
        %2305 = vmatprep.mubr.bf16.mxu0 0
        %2306 = vmatmul.mubr.bf16.gmra.mrb[0].mxu0 %v802
        %v2307 = vpop.f32.mrb[0].mxu0
        %v2308 = vadd.f32 %v2195, %v2307
        %v2309 = vpop.f32.mrb[0].mxu0
        %v2310 = vadd.f32 %v2197, %v2309
        %v2311 = vpop.f32.mrb[0].mxu0
        %v2312 = vadd.f32 %v2199, %v2311
        %v2313 = vpop.f32.mrb[0].mxu0
        %v2314 = vadd.f32 %v2201, %v2313
        %2315 = vmatprep.mubr.bf16.mxu0 0
        %2316 = vmatmul.mubr.bf16.gmra.mrb[0].mxu0 %v807
        %v2317 = vpop.f32.mrb[0].mxu0
        %v2318 = vadd.f32 %v2205, %v2317
        %v2319 = vpop.f32.mrb[0].mxu0
        %v2320 = vadd.f32 %v2207, %v2319
        %v2321 = vpop.f32.mrb[0].mxu0
        %v2322 = vadd.f32 %v2209, %v2321
        %v2323 = vpop.f32.mrb[0].mxu0
        %v2324 = vadd.f32 %v2211, %v2323
        %2325 = vdwg.mxu0
        %v2326 = vadd.f32 %v368, %v1909
        %v2327 = vadd.f32 %v369, %v1911
        %v2328 = vadd.f32 %v370, %v2248
        %v2329 = vadd.f32 %v371, %v2250
        %v2330 = vadd.f32 %v372, %v1913
        %v2331 = vadd.f32 %v373, %v1915
        %v2332 = vadd.f32 %v374, %v2252
        %v2333 = vadd.f32 %v375, %v2254
        %v2334 = vadd.f32 %v376, %v1919
        %v2335 = vadd.f32 %v377, %v1921
        %v2336 = vadd.f32 %v378, %v2258
        %v2337 = vadd.f32 %v379, %v2260
        %v2338 = vadd.f32 %v380, %v1923
        %v2339 = vadd.f32 %v381, %v1925
        %v2340 = vadd.f32 %v382, %v2262
        %v2341 = vadd.f32 %v383, %v2264
        %v2342 = vadd.f32 %v384, %v1929
        %v2343 = vadd.f32 %v385, %v1931
        %v2344 = vadd.f32 %v386, %v2268
        %v2345 = vadd.f32 %v387, %v2270
        %v2346 = vadd.f32 %v388, %v1933
        %v2347 = vadd.f32 %v389, %v1935
        %v2348 = vadd.f32 %v390, %v2272
        %v2349 = vadd.f32 %v391, %v2274
        %v2350 = vadd.f32 %v392, %v1939
        %v2351 = vadd.f32 %v393, %v1941
        %v2352 = vadd.f32 %v394, %v2278
        %v2353 = vadd.f32 %v395, %v2280
        %v2354 = vadd.f32 %v396, %v1943
        %v2355 = vadd.f32 %v397, %v1945
        %v2356 = vadd.f32 %v398, %v2282
        %v2357 = vadd.f32 %v399, %v2284
        %v2358 = vadd.f32 %v400, %v1949
        %v2359 = vadd.f32 %v401, %v1951
        %v2360 = vadd.f32 %v402, %v2288
        %v2361 = vadd.f32 %v403, %v2290
        %v2362 = vadd.f32 %v404, %v1953
        %v2363 = vadd.f32 %v405, %v1955
        %v2364 = vadd.f32 %v406, %v2292
        %v2365 = vadd.f32 %v407, %v2294
        %v2366 = vadd.f32 %v408, %v1959
        %v2367 = vadd.f32 %v409, %v1961
        %v2368 = vadd.f32 %v410, %v2298
        %v2369 = vadd.f32 %v411, %v2300
        %v2370 = vadd.f32 %v412, %v1963
        %v2371 = vadd.f32 %v413, %v1965
        %v2372 = vadd.f32 %v414, %v2302
        %v2373 = vadd.f32 %v415, %v2304
        %v2374 = vadd.f32 %v416, %v1969
        %v2375 = vadd.f32 %v417, %v1971
        %v2376 = vadd.f32 %v418, %v2308
        %v2377 = vadd.f32 %v419, %v2310
        %v2378 = vadd.f32 %v420, %v1973
        %v2379 = vadd.f32 %v421, %v1975
        %v2380 = vadd.f32 %v422, %v2312
        %v2381 = vadd.f32 %v423, %v2314
        %v2382 = vadd.f32 %v424, %v1979
        %v2383 = vadd.f32 %v425, %v1981
        %v2384 = vadd.f32 %v426, %v2318
        %v2385 = vadd.f32 %v427, %v2320
        %v2386 = vadd.f32 %v428, %v1983
        %v2387 = vadd.f32 %v429, %v1985
        %v2388 = vadd.f32 %v430, %v2322
        %v2389 = vadd.f32 %v431, %v2324
        %2390 = vst [vmem:[#allocation2] sm:$0xff] %v2326
        %2391 = vst [vmem:[#allocation2 + $0x8] sm:$0xff] %v2327
        %2392 = vst [vmem:[#allocation2 + $0x10] sm:$0xff] %v2328
        %2393 = vst [vmem:[#allocation2 + $0x18] sm:$0xff] %v2329
        %2394 = vst [vmem:[#allocation2 + $0x20] sm:$0xff] %v2330
        %2395 = vst [vmem:[#allocation2 + $0x28] sm:$0xff] %v2331
        %2396 = vst [vmem:[#allocation2 + $0x30] sm:$0xff] %v2332
        %2397 = vst [vmem:[#allocation2 + $0x38] sm:$0xff] %v2333
        %2398 = vst [vmem:[#allocation2 + $0x40] sm:$0xff] %v2334
        %2399 = vst [vmem:[#allocation2 + $0x48] sm:$0xff] %v2335
        %2400 = vst [vmem:[#allocation2 + $0x50] sm:$0xff] %v2336
        %2401 = vst [vmem:[#allocation2 + $0x58] sm:$0xff] %v2337
        %2402 = vst [vmem:[#allocation2 + $0x60] sm:$0xff] %v2338
        %2403 = vst [vmem:[#allocation2 + $0x68] sm:$0xff] %v2339
        %2404 = vst [vmem:[#allocation2 + $0x70] sm:$0xff] %v2340
        %2405 = vst [vmem:[#allocation2 + $0x78] sm:$0xff] %v2341
        %2406 = vst [vmem:[#allocation2 + $0x80] sm:$0xff] %v2342
        %2407 = vst [vmem:[#allocation2 + $0x88] sm:$0xff] %v2343
        %2408 = vst [vmem:[#allocation2 + $0x90] sm:$0xff] %v2344
        %2409 = vst [vmem:[#allocation2 + $0x98] sm:$0xff] %v2345
        %2410 = vst [vmem:[#allocation2 + $0xa0] sm:$0xff] %v2346
        %2411 = vst [vmem:[#allocation2 + $0xa8] sm:$0xff] %v2347
        %2412 = vst [vmem:[#allocation2 + $0xb0] sm:$0xff] %v2348
        %2413 = vst [vmem:[#allocation2 + $0xb8] sm:$0xff] %v2349
        %2414 = vst [vmem:[#allocation2 + $0xc0] sm:$0xff] %v2350
        %2415 = vst [vmem:[#allocation2 + $0xc8] sm:$0xff] %v2351
        %2416 = vst [vmem:[#allocation2 + $0xd0] sm:$0xff] %v2352
        %2417 = vst [vmem:[#allocation2 + $0xd8] sm:$0xff] %v2353
        %2418 = vst [vmem:[#allocation2 + $0xe0] sm:$0xff] %v2354
        %2419 = vst [vmem:[#allocation2 + $0xe8] sm:$0xff] %v2355
        %2420 = vst [vmem:[#allocation2 + $0xf0] sm:$0xff] %v2356
        %2421 = vst [vmem:[#allocation2 + $0xf8] sm:$0xff] %v2357
        %2422 = vst [vmem:[#allocation2 + $0x100] sm:$0xff] %v2358
        %2423 = vst [vmem:[#allocation2 + $0x108] sm:$0xff] %v2359
        %2424 = vst [vmem:[#allocation2 + $0x110] sm:$0xff] %v2360
        %2425 = vst [vmem:[#allocation2 + $0x118] sm:$0xff] %v2361
        %2426 = vst [vmem:[#allocation2 + $0x120] sm:$0xff] %v2362
        %2427 = vst [vmem:[#allocation2 + $0x128] sm:$0xff] %v2363
        %2428 = vst [vmem:[#allocation2 + $0x130] sm:$0xff] %v2364
        %2429 = vst [vmem:[#allocation2 + $0x138] sm:$0xff] %v2365
        %2430 = vst [vmem:[#allocation2 + $0x140] sm:$0xff] %v2366
        %2431 = vst [vmem:[#allocation2 + $0x148] sm:$0xff] %v2367
        %2432 = vst [vmem:[#allocation2 + $0x150] sm:$0xff] %v2368
        %2433 = vst [vmem:[#allocation2 + $0x158] sm:$0xff] %v2369
        %2434 = vst [vmem:[#allocation2 + $0x160] sm:$0xff] %v2370
        %2435 = vst [vmem:[#allocation2 + $0x168] sm:$0xff] %v2371
        %2436 = vst [vmem:[#allocation2 + $0x170] sm:$0xff] %v2372
        %2437 = vst [vmem:[#allocation2 + $0x178] sm:$0xff] %v2373
        %2438 = vst [vmem:[#allocation2 + $0x180] sm:$0xff] %v2374
        %2439 = vst [vmem:[#allocation2 + $0x188] sm:$0xff] %v2375
        %2440 = vst [vmem:[#allocation2 + $0x190] sm:$0xff] %v2376
        %2441 = vst [vmem:[#allocation2 + $0x198] sm:$0xff] %v2377
        %2442 = vst [vmem:[#allocation2 + $0x1a0] sm:$0xff] %v2378
        %2443 = vst [vmem:[#allocation2 + $0x1a8] sm:$0xff] %v2379
        %2444 = vst [vmem:[#allocation2 + $0x1b0] sm:$0xff] %v2380
        %2445 = vst [vmem:[#allocation2 + $0x1b8] sm:$0xff] %v2381
        %2446 = vst [vmem:[#allocation2 + $0x1c0] sm:$0xff] %v2382
        %2447 = vst [vmem:[#allocation2 + $0x1c8] sm:$0xff] %v2383
        %2448 = vst [vmem:[#allocation2 + $0x1d0] sm:$0xff] %v2384
        %2449 = vst [vmem:[#allocation2 + $0x1d8] sm:$0xff] %v2385
        %2450 = vst [vmem:[#allocation2 + $0x1e0] sm:$0xff] %v2386
        %2451 = vst [vmem:[#allocation2 + $0x1e8] sm:$0xff] %v2387
        %2452 = vst [vmem:[#allocation2 + $0x1f0] sm:$0xff] %v2388
        %2453 = vst [vmem:[#allocation2 + $0x1f8] sm:$0xff] %v2389
        // Predicated region
        $region45: #{pallas_linear.1} parent=31 // pred_check
          %p2454 = pneg %p300
        $region46: #{pallas_linear.1} parent=31 // pred_check_branch
          %2456 = sbr.rel (%p2454) target = $region48
        $region47: #{pallas_linear.1} parent=31 // pred_region
          %v2457 = vld [vmem:[#allocation2] sm:$0xff]
          %v2458 = vld [vmem:[#allocation2 + $0x8] sm:$0xff]
          %v2459 = vld [vmem:[#allocation2 + $0x10] sm:$0xff]
          %v2460 = vld [vmem:[#allocation2 + $0x18] sm:$0xff]
          %v2461 = vld [vmem:[#allocation2 + $0x20] sm:$0xff]
          %v2462 = vld [vmem:[#allocation2 + $0x28] sm:$0xff]
          %v2463 = vld [vmem:[#allocation2 + $0x30] sm:$0xff]
          %v2464 = vld [vmem:[#allocation2 + $0x38] sm:$0xff]
          %v2465 = vld [vmem:[#allocation2 + $0x40] sm:$0xff]
          %v2466 = vld [vmem:[#allocation2 + $0x48] sm:$0xff]
          %v2467 = vld [vmem:[#allocation2 + $0x50] sm:$0xff]
          %v2468 = vld [vmem:[#allocation2 + $0x58] sm:$0xff]
          %v2469 = vld [vmem:[#allocation2 + $0x60] sm:$0xff]
          %v2470 = vld [vmem:[#allocation2 + $0x68] sm:$0xff]
          %v2471 = vld [vmem:[#allocation2 + $0x70] sm:$0xff]
          %v2472 = vld [vmem:[#allocation2 + $0x78] sm:$0xff]
          %v2473 = vld [vmem:[#allocation2 + $0x80] sm:$0xff]
          %v2474 = vld [vmem:[#allocation2 + $0x88] sm:$0xff]
          %v2475 = vld [vmem:[#allocation2 + $0x90] sm:$0xff]
          %v2476 = vld [vmem:[#allocation2 + $0x98] sm:$0xff]
          %v2477 = vld [vmem:[#allocation2 + $0xa0] sm:$0xff]
          %v2478 = vld [vmem:[#allocation2 + $0xa8] sm:$0xff]
          %v2479 = vld [vmem:[#allocation2 + $0xb0] sm:$0xff]
          %v2480 = vld [vmem:[#allocation2 + $0xb8] sm:$0xff]
          %v2481 = vld [vmem:[#allocation2 + $0xc0] sm:$0xff]
          %v2482 = vld [vmem:[#allocation2 + $0xc8] sm:$0xff]
          %v2483 = vld [vmem:[#allocation2 + $0xd0] sm:$0xff]
          %v2484 = vld [vmem:[#allocation2 + $0xd8] sm:$0xff]
          %v2485 = vld [vmem:[#allocation2 + $0xe0] sm:$0xff]
          %v2486 = vld [vmem:[#allocation2 + $0xe8] sm:$0xff]
          %v2487 = vld [vmem:[#allocation2 + $0xf0] sm:$0xff]
          %v2488 = vld [vmem:[#allocation2 + $0xf8] sm:$0xff]
          %v2489 = vld [vmem:[#allocation2 + $0x100] sm:$0xff]
          %v2490 = vld [vmem:[#allocation2 + $0x108] sm:$0xff]
          %v2491 = vld [vmem:[#allocation2 + $0x110] sm:$0xff]
          %v2492 = vld [vmem:[#allocation2 + $0x118] sm:$0xff]
          %v2493 = vld [vmem:[#allocation2 + $0x120] sm:$0xff]
          %v2494 = vld [vmem:[#allocation2 + $0x128] sm:$0xff]
          %v2495 = vld [vmem:[#allocation2 + $0x130] sm:$0xff]
          %v2496 = vld [vmem:[#allocation2 + $0x138] sm:$0xff]
          %v2497 = vld [vmem:[#allocation2 + $0x140] sm:$0xff]
          %v2498 = vld [vmem:[#allocation2 + $0x148] sm:$0xff]
          %v2499 = vld [vmem:[#allocation2 + $0x150] sm:$0xff]
          %v2500 = vld [vmem:[#allocation2 + $0x158] sm:$0xff]
          %v2501 = vld [vmem:[#allocation2 + $0x160] sm:$0xff]
          %v2502 = vld [vmem:[#allocation2 + $0x168] sm:$0xff]
          %v2503 = vld [vmem:[#allocation2 + $0x170] sm:$0xff]
          %v2504 = vld [vmem:[#allocation2 + $0x178] sm:$0xff]
          %v2505 = vld [vmem:[#allocation2 + $0x180] sm:$0xff]
          %v2506 = vld [vmem:[#allocation2 + $0x188] sm:$0xff]
          %v2507 = vld [vmem:[#allocation2 + $0x190] sm:$0xff]
          %v2508 = vld [vmem:[#allocation2 + $0x198] sm:$0xff]
          %v2509 = vld [vmem:[#allocation2 + $0x1a0] sm:$0xff]
          %v2510 = vld [vmem:[#allocation2 + $0x1a8] sm:$0xff]
          %v2511 = vld [vmem:[#allocation2 + $0x1b0] sm:$0xff]
          %v2512 = vld [vmem:[#allocation2 + $0x1b8] sm:$0xff]
          %v2513 = vld [vmem:[#allocation2 + $0x1c0] sm:$0xff]
          %v2514 = vld [vmem:[#allocation2 + $0x1c8] sm:$0xff]
          %v2515 = vld [vmem:[#allocation2 + $0x1d0] sm:$0xff]
          %v2516 = vld [vmem:[#allocation2 + $0x1d8] sm:$0xff]
          %v2517 = vld [vmem:[#allocation2 + $0x1e0] sm:$0xff]
          %v2518 = vld [vmem:[#allocation2 + $0x1e8] sm:$0xff]
          %v2519 = vld [vmem:[#allocation2 + $0x1f0] sm:$0xff]
          %v2520 = vld [vmem:[#allocation2 + $0x1f8] sm:$0xff]
          %v2521 = vld [vmem:[%s244] sm:$0xf]
          %v2523 = vlaneseq
          %v2524 = vshrl.u32 %v2523, 7
          %v2525 = vsub.s32 0, %v2524
          %v2526 = vrot.slane %v2521, %v2525
          %v2527 = vlaneseq
          %v2528 = vshrl.u32 %v2527, 7
          %v2529 = vsub.s32 1, %v2528
          %v2530 = vrot.slane %v2521, %v2529
          %v2531 = vlaneseq
          %v2532 = vshrl.u32 %v2531, 7
          %v2533 = vsub.s32 2, %v2532
          %v2534 = vrot.slane %v2521, %v2533
          %v2535 = vlaneseq
          %v2536 = vshrl.u32 %v2535, 7
          %v2537 = vsub.s32 3, %v2536
          %v2538 = vrot.slane %v2521, %v2537
          %v2543 = vadd.f32 %v2457, %v2526
          %v2544 = vadd.f32 %v2458, %v2530
          %v2545 = vadd.f32 %v2459, %v2534
          %v2546 = vadd.f32 %v2460, %v2538
          %v2547 = vadd.f32 %v2461, %v2526
          %v2548 = vadd.f32 %v2462, %v2530
          %v2549 = vadd.f32 %v2463, %v2534
          %v2550 = vadd.f32 %v2464, %v2538
          %v2551 = vadd.f32 %v2465, %v2526
          %v2552 = vadd.f32 %v2466, %v2530
          %v2553 = vadd.f32 %v2467, %v2534
          %v2554 = vadd.f32 %v2468, %v2538
          %v2555 = vadd.f32 %v2469, %v2526
          %v2556 = vadd.f32 %v2470, %v2530
          %v2557 = vadd.f32 %v2471, %v2534
          %v2558 = vadd.f32 %v2472, %v2538
          %v2559 = vadd.f32 %v2473, %v2526
          %v2560 = vadd.f32 %v2474, %v2530
          %v2561 = vadd.f32 %v2475, %v2534
          %v2562 = vadd.f32 %v2476, %v2538
          %v2563 = vadd.f32 %v2477, %v2526
          %v2564 = vadd.f32 %v2478, %v2530
          %v2565 = vadd.f32 %v2479, %v2534
          %v2566 = vadd.f32 %v2480, %v2538
          %v2567 = vadd.f32 %v2481, %v2526
          %v2568 = vadd.f32 %v2482, %v2530
          %v2569 = vadd.f32 %v2483, %v2534
          %v2570 = vadd.f32 %v2484, %v2538
          %v2571 = vadd.f32 %v2485, %v2526
          %v2572 = vadd.f32 %v2486, %v2530
          %v2573 = vadd.f32 %v2487, %v2534
          %v2574 = vadd.f32 %v2488, %v2538
          %v2575 = vadd.f32 %v2489, %v2526
          %v2576 = vadd.f32 %v2490, %v2530
          %v2577 = vadd.f32 %v2491, %v2534
          %v2578 = vadd.f32 %v2492, %v2538
          %v2579 = vadd.f32 %v2493, %v2526
          %v2580 = vadd.f32 %v2494, %v2530
          %v2581 = vadd.f32 %v2495, %v2534
          %v2582 = vadd.f32 %v2496, %v2538
          %v2583 = vadd.f32 %v2497, %v2526
          %v2584 = vadd.f32 %v2498, %v2530
          %v2585 = vadd.f32 %v2499, %v2534
          %v2586 = vadd.f32 %v2500, %v2538
          %v2587 = vadd.f32 %v2501, %v2526
          %v2588 = vadd.f32 %v2502, %v2530
          %v2589 = vadd.f32 %v2503, %v2534
          %v2590 = vadd.f32 %v2504, %v2538
          %v2591 = vadd.f32 %v2505, %v2526
          %v2592 = vadd.f32 %v2506, %v2530
          %v2593 = vadd.f32 %v2507, %v2534
          %v2594 = vadd.f32 %v2508, %v2538
          %v2595 = vadd.f32 %v2509, %v2526
          %v2596 = vadd.f32 %v2510, %v2530
          %v2597 = vadd.f32 %v2511, %v2534
          %v2598 = vadd.f32 %v2512, %v2538
          %v2599 = vadd.f32 %v2513, %v2526
          %v2600 = vadd.f32 %v2514, %v2530
          %v2601 = vadd.f32 %v2515, %v2534
          %v2602 = vadd.f32 %v2516, %v2538
          %v2603 = vadd.f32 %v2517, %v2526
          %v2604 = vadd.f32 %v2518, %v2530
          %v2605 = vadd.f32 %v2519, %v2534
          %v2606 = vadd.f32 %v2520, %v2538
          %v2607 = vpack.c.bf16 %v2547, %v2543
          %v2608 = vpack.c.bf16 %v2548, %v2544
          %v2609 = vpack.c.bf16 %v2549, %v2545
          %v2610 = vpack.c.bf16 %v2550, %v2546
          %v2611 = vpack.c.bf16 %v2555, %v2551
          %v2612 = vpack.c.bf16 %v2556, %v2552
          %v2613 = vpack.c.bf16 %v2557, %v2553
          %v2614 = vpack.c.bf16 %v2558, %v2554
          %v2615 = vpack.c.bf16 %v2563, %v2559
          %v2616 = vpack.c.bf16 %v2564, %v2560
          %v2617 = vpack.c.bf16 %v2565, %v2561
          %v2618 = vpack.c.bf16 %v2566, %v2562
          %v2619 = vpack.c.bf16 %v2571, %v2567
          %v2620 = vpack.c.bf16 %v2572, %v2568
          %v2621 = vpack.c.bf16 %v2573, %v2569
          %v2622 = vpack.c.bf16 %v2574, %v2570
          %v2623 = vpack.c.bf16 %v2579, %v2575
          %v2624 = vpack.c.bf16 %v2580, %v2576
          %v2625 = vpack.c.bf16 %v2581, %v2577
          %v2626 = vpack.c.bf16 %v2582, %v2578
          %v2627 = vpack.c.bf16 %v2587, %v2583
          %v2628 = vpack.c.bf16 %v2588, %v2584
          %v2629 = vpack.c.bf16 %v2589, %v2585
          %v2630 = vpack.c.bf16 %v2590, %v2586
          %v2631 = vpack.c.bf16 %v2595, %v2591
          %v2632 = vpack.c.bf16 %v2596, %v2592
          %v2633 = vpack.c.bf16 %v2597, %v2593
          %v2634 = vpack.c.bf16 %v2598, %v2594
          %v2635 = vpack.c.bf16 %v2603, %v2599
          %v2636 = vpack.c.bf16 %v2604, %v2600
          %v2637 = vpack.c.bf16 %v2605, %v2601
          %v2638 = vpack.c.bf16 %v2606, %v2602
          %v2671 = vunpack.c.l.b16 %v2607
          %v2672 = vunpack.c.l.b16 %v2608
          %v2673 = vunpack.c.l.b16 %v2609
          %v2674 = vunpack.c.l.b16 %v2610
          %v2675 = vunpack.c.h.b16 %v2607
          %v2676 = vunpack.c.h.b16 %v2608
          %v2677 = vunpack.c.h.b16 %v2609
          %v2678 = vunpack.c.h.b16 %v2610
          %v2679 = vunpack.c.l.b16 %v2611
          %v2680 = vunpack.c.l.b16 %v2612
          %v2681 = vunpack.c.l.b16 %v2613
          %v2682 = vunpack.c.l.b16 %v2614
          %v2683 = vunpack.c.h.b16 %v2611
          %v2684 = vunpack.c.h.b16 %v2612
          %v2685 = vunpack.c.h.b16 %v2613
          %v2686 = vunpack.c.h.b16 %v2614
          %v2687 = vunpack.c.l.b16 %v2615
          %v2688 = vunpack.c.l.b16 %v2616
          %v2689 = vunpack.c.l.b16 %v2617
          %v2690 = vunpack.c.l.b16 %v2618
          %v2691 = vunpack.c.h.b16 %v2615
          %v2692 = vunpack.c.h.b16 %v2616
          %v2693 = vunpack.c.h.b16 %v2617
          %v2694 = vunpack.c.h.b16 %v2618
          %v2695 = vunpack.c.l.b16 %v2619
          %v2696 = vunpack.c.l.b16 %v2620
          %v2697 = vunpack.c.l.b16 %v2621
          %v2698 = vunpack.c.l.b16 %v2622
          %v2699 = vunpack.c.h.b16 %v2619
          %v2700 = vunpack.c.h.b16 %v2620
          %v2701 = vunpack.c.h.b16 %v2621
          %v2702 = vunpack.c.h.b16 %v2622
          %v2703 = vunpack.c.l.b16 %v2623
          %v2704 = vunpack.c.l.b16 %v2624
          %v2705 = vunpack.c.l.b16 %v2625
          %v2706 = vunpack.c.l.b16 %v2626
          %v2707 = vunpack.c.h.b16 %v2623
          %v2708 = vunpack.c.h.b16 %v2624
          %v2709 = vunpack.c.h.b16 %v2625
          %v2710 = vunpack.c.h.b16 %v2626
          %v2711 = vunpack.c.l.b16 %v2627
          %v2712 = vunpack.c.l.b16 %v2628
          %v2713 = vunpack.c.l.b16 %v2629
          %v2714 = vunpack.c.l.b16 %v2630
          %v2715 = vunpack.c.h.b16 %v2627
          %v2716 = vunpack.c.h.b16 %v2628
          %v2717 = vunpack.c.h.b16 %v2629
          %v2718 = vunpack.c.h.b16 %v2630
          %v2719 = vunpack.c.l.b16 %v2631
          %v2720 = vunpack.c.l.b16 %v2632
          %v2721 = vunpack.c.l.b16 %v2633
          %v2722 = vunpack.c.l.b16 %v2634
          %v2723 = vunpack.c.h.b16 %v2631
          %v2724 = vunpack.c.h.b16 %v2632
          %v2725 = vunpack.c.h.b16 %v2633
          %v2726 = vunpack.c.h.b16 %v2634
          %v2727 = vunpack.c.l.b16 %v2635
          %v2728 = vunpack.c.l.b16 %v2636
          %v2729 = vunpack.c.l.b16 %v2637
          %v2730 = vunpack.c.l.b16 %v2638
          %v2731 = vunpack.c.h.b16 %v2635
          %v2732 = vunpack.c.h.b16 %v2636
          %v2733 = vunpack.c.h.b16 %v2637
          %v2734 = vunpack.c.h.b16 %v2638
          %v2735 = vpack.c.b16 %v2672, %v2671
          %v2736 = vpack.c.b16 %v2674, %v2673
          %v2737 = vpack.c.b16 %v2676, %v2675
          %v2738 = vpack.c.b16 %v2678, %v2677
          %v2739 = vpack.c.b16 %v2680, %v2679
          %v2740 = vpack.c.b16 %v2682, %v2681
          %v2741 = vpack.c.b16 %v2684, %v2683
          %v2742 = vpack.c.b16 %v2686, %v2685
          %v2743 = vpack.c.b16 %v2688, %v2687
          %v2744 = vpack.c.b16 %v2690, %v2689
          %v2745 = vpack.c.b16 %v2692, %v2691
          %v2746 = vpack.c.b16 %v2694, %v2693
          %v2747 = vpack.c.b16 %v2696, %v2695
          %v2748 = vpack.c.b16 %v2698, %v2697
          %v2749 = vpack.c.b16 %v2700, %v2699
          %v2750 = vpack.c.b16 %v2702, %v2701
          %v2751 = vpack.c.b16 %v2704, %v2703
          %v2752 = vpack.c.b16 %v2706, %v2705
          %v2753 = vpack.c.b16 %v2708, %v2707
          %v2754 = vpack.c.b16 %v2710, %v2709
          %v2755 = vpack.c.b16 %v2712, %v2711
          %v2756 = vpack.c.b16 %v2714, %v2713
          %v2757 = vpack.c.b16 %v2716, %v2715
          %v2758 = vpack.c.b16 %v2718, %v2717
          %v2759 = vpack.c.b16 %v2720, %v2719
          %v2760 = vpack.c.b16 %v2722, %v2721
          %v2761 = vpack.c.b16 %v2724, %v2723
          %v2762 = vpack.c.b16 %v2726, %v2725
          %v2763 = vpack.c.b16 %v2728, %v2727
          %v2764 = vpack.c.b16 %v2730, %v2729
          %v2765 = vpack.c.b16 %v2732, %v2731
          %v2766 = vpack.c.b16 %v2734, %v2733
          %2799 = vst [vmem:[%s281] sm:$0xff] %v2735
          %2800 = vst [vmem:[%s281 + $0x8] sm:$0xff] %v2736
          %2801 = vst [vmem:[%s281 + $0x10] sm:$0xff] %v2737
          %2802 = vst [vmem:[%s281 + $0x18] sm:$0xff] %v2738
          %2803 = vst [vmem:[%s281 + $0x20] sm:$0xff] %v2739
          %2804 = vst [vmem:[%s281 + $0x28] sm:$0xff] %v2740
          %2805 = vst [vmem:[%s281 + $0x30] sm:$0xff] %v2741
          %2806 = vst [vmem:[%s281 + $0x38] sm:$0xff] %v2742
          %2807 = vst [vmem:[%s281 + $0x40] sm:$0xff] %v2743
          %2808 = vst [vmem:[%s281 + $0x48] sm:$0xff] %v2744
          %2809 = vst [vmem:[%s281 + $0x50] sm:$0xff] %v2745
          %2810 = vst [vmem:[%s281 + $0x58] sm:$0xff] %v2746
          %2811 = vst [vmem:[%s281 + $0x60] sm:$0xff] %v2747
          %2812 = vst [vmem:[%s281 + $0x68] sm:$0xff] %v2748
          %2813 = vst [vmem:[%s281 + $0x70] sm:$0xff] %v2749
          %2814 = vst [vmem:[%s281 + $0x78] sm:$0xff] %v2750
          %2815 = vst [vmem:[%s281 + $0x80] sm:$0xff] %v2751
          %2816 = vst [vmem:[%s281 + $0x88] sm:$0xff] %v2752
          %2817 = vst [vmem:[%s281 + $0x90] sm:$0xff] %v2753
          %2818 = vst [vmem:[%s281 + $0x98] sm:$0xff] %v2754
          %2819 = vst [vmem:[%s281 + $0xa0] sm:$0xff] %v2755
          %2820 = vst [vmem:[%s281 + $0xa8] sm:$0xff] %v2756
          %2821 = vst [vmem:[%s281 + $0xb0] sm:$0xff] %v2757
          %2822 = vst [vmem:[%s281 + $0xb8] sm:$0xff] %v2758
          %2823 = vst [vmem:[%s281 + $0xc0] sm:$0xff] %v2759
          %2824 = vst [vmem:[%s281 + $0xc8] sm:$0xff] %v2760
          %2825 = vst [vmem:[%s281 + $0xd0] sm:$0xff] %v2761
          %2826 = vst [vmem:[%s281 + $0xd8] sm:$0xff] %v2762
          %2827 = vst [vmem:[%s281 + $0xe0] sm:$0xff] %v2763
          %2828 = vst [vmem:[%s281 + $0xe8] sm:$0xff] %v2764
          %2829 = vst [vmem:[%s281 + $0xf0] sm:$0xff] %v2765
          %2830 = vst [vmem:[%s281 + $0xf8] sm:$0xff] %v2766
        $region48: #{pallas_linear.1} parent=31 // pred_fallthru
          _
        %s2831 = sand.u32 %s134, 1
        %s2832 = scalar_lea.sflag [#allocation5], %s2831
        %s2833 = sand.u32 %s134, 1
        %s2834 = smul.addr %s2833, 256
        %s2835 = scalar_lea.vmem [#allocation8], %s2834
        // Predicated region
        $region49: #{pallas_linear.1} parent=31 // pred_check
          %p2836 = pneg %p144
        $region50: #{pallas_linear.1} parent=31 // pred_check_branch
          %2838 = sbr.rel (%p2836) target = $region52
        $region51: #{pallas_linear.1} parent=31 // pred_region
          %s2839 = smul.u32 16, %s28
          %s2840 = smul.u32 4, %s29
          %s2842 = ssub.s32 4096, 4096
          %2843 = vsyncadd %s2832, %s2842
          %s2844 = smul.addr %s2839, 48
          %s2845 = sadd.s32 %s2840, %s2844
          %s2846 = smul.addr %s2845, 64
          %s2847 = scalar_lea.hbm %s3, %s2846
          %s2848 = sshll.u32 %s2835, 4
          %s2849 = int_to_ptr.vmem [resolvable:$true] %s2848
          %2854 = dma.vmem_to_hbm [thread:$0]  %s2849, 4096, %s2847, %s2832, 256, 3072, 16
        $region52: #{pallas_linear.1} parent=31 // pred_fallthru
          _
      $region32: #{pallas_linear.1} parent=5 // pred_fallthru
        _
      %p2855 = scmp.le.s32.totalorder 2, %s18
      // Predicated region
      $region53: #{pallas_linear.1} parent=5 // pred_check
        %p2856 = pneg %p2855
      $region54: #{pallas_linear.1} parent=5 // pred_check_branch
        %2858 = sbr.rel (%p2856) target = $region56
      $region55: #{pallas_linear.1} parent=5 // pred_region
        %s2859 = ssub.s32 %s18, 2
        // Predicated region
        $region57: #{pallas_linear.1} parent=55 // pred_check
          %p2860 = pneg %p150
        $region58: #{pallas_linear.1} parent=55 // pred_check_branch
          %2862 = sbr.rel (%p2860) target = $region60
        $region59: #{pallas_linear.1} parent=55 // pred_region
          %s2863 = sand.u32 %s135, 1
          %s2864 = scalar_lea.sflag [#allocation5], %s2863
          %s2865 = sand.u32 %s135, 1
          %s2866 = smul.addr %s2865, 256
          %s2867 = scalar_lea.vmem [#allocation8], %s2866
          %2868 = dma.done %s2864, 4096
        $region60: #{pallas_linear.1} parent=55 // pred_fallthru
          _
      $region56: #{pallas_linear.1} parent=5 // pred_fallthru
        _
    $region6: #{pallas_linear.1} parent=1 // loop_footer
      %s22 = sadd.s32 1, %s18
    $region7: #{pallas_linear.1} parent=1 // loop_footer_branch
      %17 = sbr.rel target = $region3
    $region8: #{pallas_linear.1} parent=1 // loop_exit
      _
    %2869 = vsyncpa [#allocation4], 1
    %s2870 = scalar_lea.sflag [#allocation4], 1
    %2871 = vsyncpa %s2870, 1
    %2872 = vsyncpa [#allocation7], 1
    %s2873 = scalar_lea.sflag [#allocation7], 1
    %2874 = vsyncpa %s2873, 1
    %2875 = vsyncpa [#allocation5], 1
    %s2876 = scalar_lea.sflag [#allocation5], 1
    %2877 = vsyncpa %s2876, 1

</llo_original>
